<compile_context>
chip_gen: v5e
topology: v5e:2x2
jax: 0.10.0
libtpu: 0.0.40
codegen_flags: <defaults>
</compile_context>

<pallas_src>
import functools
import math

import jax
import jax.numpy as jnp
from jax.experimental import pallas as pl
from jax.experimental.pallas import tpu as pltpu


# ---------------- fused RG kernel -------------------------------------------

def _rg_kernel(x_ref, w_ref, b_ref, o_ref, hpad_ref, *, H, WC, n_resblocks):
    # x_ref:    (1, H, WC)       one batch element, lane-dense W*C layout
    # w_ref:    (L, 3, WC, WC)   per-layer, per-dy block-banded weights
    # b_ref:    (L, 1, WC)       per-layer bias broadcast over W
    # o_ref:    (1, H, WC)
    # hpad_ref: (H+2, WC) f32    running activation with 1-row H halo (VMEM)
    zero_row = jnp.zeros((1, WC), jnp.float32)
    hpad_ref[0:1, :] = zero_row                 # top halo (zero padding)
    hpad_ref[H + 1:H + 2, :] = zero_row         # bottom halo
    hpad_ref[1:H + 1, :] = x_ref[0].astype(jnp.float32)

    def conv(layer, relu):
        # 3x3 SAME conv: 3 MXU matmuls; dx taps / Cin / W zero-padding are all
        # folded into the K = WC contraction of the banded weight matrix.
        acc = jnp.dot(hpad_ref[0:H, :], w_ref[layer, 0],
                      preferred_element_type=jnp.float32)
        acc = acc + jnp.dot(hpad_ref[1:H + 1, :], w_ref[layer, 1],
                            preferred_element_type=jnp.float32)
        acc = acc + jnp.dot(hpad_ref[2:H + 2, :], w_ref[layer, 2],
                            preferred_element_type=jnp.float32)
        acc = acc + b_ref[layer]
        if relu:
            acc = jnp.maximum(acc, 0.0)
        return acc

    for rb in range(n_resblocks):
        h_in = hpad_ref[1:H + 1, :]              # residual input of this block
        t = conv(2 * rb, relu=True)              # conv1 + ReLU
        hpad_ref[1:H + 1, :] = t
        r = conv(2 * rb + 1, relu=False)         # conv2
        hpad_ref[1:H + 1, :] = r + h_in          # res_scale = 1

    tail = conv(2 * n_resblocks, relu=False)     # RG tail conv
    o_ref[0] = (0.2 * tail + x_ref[0].astype(jnp.float32)).astype(o_ref.dtype)


# ---------------- wrapper: weight banding + pallas_call ----------------------

def _build_band_params(blocks, final, W):
    """Fold (3,3,Cin,Cout) HWIO conv weights into (L, 3, W*C, W*C) banded
    matrices (dx taps + Cin contraction + W zero padding) and (L, 1, W*C) bias.
    """
    ws, bs = [], []
    for (w1, b1), (w2, b2) in blocks:
        ws += [w1, w2]
        bs += [b1, b2]
    wf, bf = final
    ws.append(wf)
    bs.append(bf)
    w_all = jnp.stack(ws)                       # (L, 3, 3, C, C)
    b_all = jnp.stack(bs)                       # (L, C)
    L, _, _, C, _ = w_all.shape
    # E[dx, w_in, w_out] = 1 iff w_in == w_out + dx - 1 (out-of-range -> 0 pad)
    E = jnp.stack([jnp.eye(W, k=1 - dx, dtype=w_all.dtype) for dx in range(3)])
    band = jnp.einsum("xio,lyxcd->lyicod", E, w_all)    # (L,3,W,C,W,C)
    band = band.reshape(L, 3, W * C, W * C)
    bias = jnp.tile(b_all, (1, W))[:, None, :]          # (L, 1, W*C)
    return band, bias


def rg_forward(x, blocks, final):
    """x: (N, H, W, C) float32 (NHWC; a PyTorch NCHW input would be transposed
    here so channels land on the lane axis)."""
    N, H, W, C = x.shape
    WC = W * C
    band, bias = _build_band_params(blocks, final, W)
    L = band.shape[0]
    n_resblocks = (L - 1) // 2
    x2 = x.reshape(N, H, WC)                    # lane-dense layout, free reshape

    kern = functools.partial(_rg_kernel, H=H, WC=WC, n_resblocks=n_resblocks)
    flops = 2 * N * L * 3 * H * WC * WC         # actual MXU flops issued
    bytes_accessed = 4 * (2 * x2.size + band.size + bias.size)

    out = pl.pallas_call(
        kern,
        out_shape=jax.ShapeDtypeStruct((N, H, WC), x.dtype),
        grid_spec=pltpu.PrefetchScalarGridSpec(
            num_scalar_prefetch=0,
            grid=(N,),
            in_specs=[
                pl.BlockSpec((1, H, WC), lambda n: (n, 0, 0)),
                # weights/bias: constant block index -> fetched once, not per step
                pl.BlockSpec((L, 3, WC, WC), lambda n: (0, 0, 0, 0)),
                pl.BlockSpec((L, 1, WC), lambda n: (0, 0, 0)),
            ],
            out_specs=pl.BlockSpec((1, H, WC), lambda n: (n, 0, 0)),
            scratch_shapes=[pltpu.VMEM((H + 2, WC), jnp.float32)],
        ),
        compiler_params=pltpu.CompilerParams(
            dimension_semantics=("parallel",)),
        cost_estimate=pl.CostEstimate(
            flops=flops, transcendentals=0, bytes_accessed=bytes_accessed),
    )(x2, band, bias)
    return out.reshape(N, H, W, C)


# ---------------- parameter init (deterministic, PyTorch-like uniform) -------

def _conv_init(key, cin, cout):
    k1, k2 = jax.random.split(key)
    bound = 1.0 / math.sqrt(cin * 9)
    w = jax.random.uniform(k1, (3, 3, cin, cout), jnp.float32, -bound, bound)
    b = jax.random.uniform(k2, (cout,), jnp.float32, -bound, bound)
    return w, b


def init_rg_params(key, n_feat, n_resblocks):
    blocks = []
    for _ in range(n_resblocks):
        key, k1, k2 = jax.random.split(key, 3)
        blocks.append((_conv_init(k1, n_feat, n_feat),
                       _conv_init(k2, n_feat, n_feat)))
    key, kf = jax.random.split(key)
    final = _conv_init(kf, n_feat, n_feat)
    return blocks, final


# ---------------- pure-JAX reference (for verification) ----------------------

def _conv_ref(x, w, b):
    y = jax.lax.conv_general_dilated(
        x, w, window_strides=(1, 1), padding="SAME",
        dimension_numbers=("NHWC", "HWIO", "NHWC"))
    return y + b


def rg_forward_ref(x, blocks, final):
    residual = x
    h = x
    for (w1, b1), (w2, b2) in blocks:
        t = jnp.maximum(_conv_ref(h, w1, b1), 0.0)
        h = _conv_ref(t, w2, b2) + h
    wf, bf = final
    return 0.2 * _conv_ref(h, wf, bf) + residual


if __name__ == "__main__":
    key = jax.random.PRNGKey(0)
    N, H, W, C = 2, 16, 16, 8      # NHWC; W*C = 128 -> one full lane group
    n_resblocks = 4                # small residual group (module default is 10)

    kx, kp = jax.random.split(key)
    x = jax.random.normal(kx, (N, H, W, C), jnp.float32)
    blocks, final = init_rg_params(kp, C, n_resblocks)

    out = jax.jit(rg_forward)(x, blocks, final)
    out = jax.block_until_ready(out)

    ref = rg_forward_ref(x, blocks, final)
    assert out.shape == (N, H, W, C)
    assert jnp.allclose(out, ref, atol=1e-4, rtol=1e-4), (
        float(jnp.max(jnp.abs(out - ref))))

    print("KERNEL_OK")
</pallas_src>

<mosaic_0001>
module attributes {stable_mosaic.version = 11 : i64} {
  func.func @_rg_kernel(%arg0: i32, %arg1: memref<1x16x128xf32, #tpu.memory_space<vmem>>, %arg2: memref<9x3x128x128xf32, #tpu.memory_space<vmem>>, %arg3: memref<9x1x128xf32, #tpu.memory_space<vmem>>, %arg4: memref<1x16x128xf32, #tpu.memory_space<vmem>>, %arg5: memref<18x128xf32, #tpu.memory_space<vmem>>) attributes {dimension_semantics = [#tpu.dimension_semantics<parallel>], iteration_bounds = array<i64: 2>, scalar_prefetch = 0 : i64, scratch_operands = 1 : i64, tpu.core_type = #tpu.core_type<tc>, window_params = [{transform_indices = @transform_0, window_bounds = array<i64: 1, 16, 128>}, {pipeline_mode = #tpu.pipeline_mode<synchronous>, transform_indices = @transform_1, window_bounds = array<i64: 9, 3, 128, 128>}, {pipeline_mode = #tpu.pipeline_mode<synchronous>, transform_indices = @transform_2, window_bounds = array<i64: 9, 1, 128>}, {transform_indices = @transform_3, window_bounds = array<i64: 1, 16, 128>}]} {
    %cst = arith.constant 0.000000e+00 : f32
    %0 = vector.broadcast %cst : f32 to vector<1x128xf32>
    %c0 = arith.constant 0 : index
    %c0_0 = arith.constant 0 : index
    %1 = vector.load %arg5[%c0, %c0_0] : memref<18x128xf32, #tpu.memory_space<vmem>>, vector<1x128xf32>
    tpu.vector_store %arg5[%c0, %c0_0], %0 {strides = array<i32>} : memref<18x128xf32, #tpu.memory_space<vmem>>, vector<1x128xf32>,
    %c17 = arith.constant 17 : index
    %c0_1 = arith.constant 0 : index
    %2 = vector.load %arg5[%c17, %c0_1] : memref<18x128xf32, #tpu.memory_space<vmem>>, vector<1x128xf32>
    tpu.vector_store %arg5[%c17, %c0_1], %0 {strides = array<i32>} : memref<18x128xf32, #tpu.memory_space<vmem>>, vector<1x128xf32>,
    %c0_2 = arith.constant 0 : index
    %c0_3 = arith.constant 0 : index
    %c0_4 = arith.constant 0 : index
    %3 = vector.load %arg1[%c0_2, %c0_3, %c0_4] : memref<1x16x128xf32, #tpu.memory_space<vmem>>, vector<1x16x128xf32>
    %4 = vector.shape_cast %3 : vector<1x16x128xf32> to vector<16x128xf32>
    %c1 = arith.constant 1 : index
    %c0_5 = arith.constant 0 : index
    %5 = vector.load %arg5[%c1, %c0_5] : memref<18x128xf32, #tpu.memory_space<vmem>>, vector<16x128xf32>
    tpu.vector_store %arg5[%c1, %c0_5], %4 {strides = array<i32>} : memref<18x128xf32, #tpu.memory_space<vmem>>, vector<16x128xf32>,
    %c1_6 = arith.constant 1 : index
    %c0_7 = arith.constant 0 : index
    %6 = vector.load %arg5[%c1_6, %c0_7] : memref<18x128xf32, #tpu.memory_space<vmem>>, vector<16x128xf32>
    %c0_8 = arith.constant 0 : index
    %c0_9 = arith.constant 0 : index
    %7 = vector.load %arg5[%c0_8, %c0_9] : memref<18x128xf32, #tpu.memory_space<vmem>>, vector<16x128xf32>
    %c0_10 = arith.constant 0 : index
    %c0_11 = arith.constant 0 : index
    %c0_12 = arith.constant 0 : index
    %c0_13 = arith.constant 0 : index
    %8 = vector.load %arg2[%c0_10, %c0_11, %c0_12, %c0_13] : memref<9x3x128x128xf32, #tpu.memory_space<vmem>>, vector<1x1x128x128xf32>
    %9 = vector.shape_cast %8 : vector<1x1x128x128xf32> to vector<128x128xf32>
    %cst_14 = arith.constant dense<0.000000e+00> : vector<16x128xf32>
    %10 = tpu.matmul %7, %9, %cst_14 {dimension_numbers = #tpu.dot_dimension_numbers<[1], [0], [0], [1], [0, 0, 1, 1], [], []>} : vector<16x128xf32>, vector<128x128xf32>, vector<16x128xf32> -> vector<16x128xf32>
    %c1_15 = arith.constant 1 : index
    %c0_16 = arith.constant 0 : index
    %11 = vector.load %arg5[%c1_15, %c0_16] : memref<18x128xf32, #tpu.memory_space<vmem>>, vector<16x128xf32>
    %c0_17 = arith.constant 0 : index
    %c1_18 = arith.constant 1 : index
    %c0_19 = arith.constant 0 : index
    %c0_20 = arith.constant 0 : index
    %12 = vector.load %arg2[%c0_17, %c1_18, %c0_19, %c0_20] : memref<9x3x128x128xf32, #tpu.memory_space<vmem>>, vector<1x1x128x128xf32>
    %13 = vector.shape_cast %12 : vector<1x1x128x128xf32> to vector<128x128xf32>
    %cst_21 = arith.constant dense<0.000000e+00> : vector<16x128xf32>
    %14 = tpu.matmul %11, %13, %cst_21 {dimension_numbers = #tpu.dot_dimension_numbers<[1], [0], [0], [1], [0, 0, 1, 1], [], []>} : vector<16x128xf32>, vector<128x128xf32>, vector<16x128xf32> -> vector<16x128xf32>
    %15 = arith.addf %10, %14 : vector<16x128xf32>
    %c2 = arith.constant 2 : index
    %c0_22 = arith.constant 0 : index
    %16 = vector.load %arg5[%c2, %c0_22] : memref<18x128xf32, #tpu.memory_space<vmem>>, vector<16x128xf32>
    %c0_23 = arith.constant 0 : index
    %c2_24 = arith.constant 2 : index
    %c0_25 = arith.constant 0 : index
    %c0_26 = arith.constant 0 : index
    %17 = vector.load %arg2[%c0_23, %c2_24, %c0_25, %c0_26] : memref<9x3x128x128xf32, #tpu.memory_space<vmem>>, vector<1x1x128x128xf32>
    %18 = vector.shape_cast %17 : vector<1x1x128x128xf32> to vector<128x128xf32>
    %cst_27 = arith.constant dense<0.000000e+00> : vector<16x128xf32>
    %19 = tpu.matmul %16, %18, %cst_27 {dimension_numbers = #tpu.dot_dimension_numbers<[1], [0], [0], [1], [0, 0, 1, 1], [], []>} : vector<16x128xf32>, vector<128x128xf32>, vector<16x128xf32> -> vector<16x128xf32>
    %20 = arith.addf %15, %19 : vector<16x128xf32>
    %c0_28 = arith.constant 0 : index
    %c0_29 = arith.constant 0 : index
    %c0_30 = arith.constant 0 : index
    %21 = vector.load %arg3[%c0_28, %c0_29, %c0_30] : memref<9x1x128xf32, #tpu.memory_space<vmem>>, vector<1x1x128xf32>
    %22 = vector.shape_cast %21 : vector<1x1x128xf32> to vector<1x128xf32>
    %23 = vector.broadcast %22 : vector<1x128xf32> to vector<16x128xf32>
    %24 = arith.addf %20, %23 : vector<16x128xf32>
    %cst_31 = arith.constant 0.000000e+00 : f32
    %25 = vector.broadcast %cst_31 : f32 to vector<16x128xf32>
    %26 = arith.maximumf %24, %25 : vector<16x128xf32>
    %c1_32 = arith.constant 1 : index
    %c0_33 = arith.constant 0 : index
    %27 = vector.load %arg5[%c1_32, %c0_33] : memref<18x128xf32, #tpu.memory_space<vmem>>, vector<16x128xf32>
    tpu.vector_store %arg5[%c1_32, %c0_33], %26 {strides = array<i32>} : memref<18x128xf32, #tpu.memory_space<vmem>>, vector<16x128xf32>,
    %c0_34 = arith.constant 0 : index
    %c0_35 = arith.constant 0 : index
    %28 = vector.load %arg5[%c0_34, %c0_35] : memref<18x128xf32, #tpu.memory_space<vmem>>, vector<16x128xf32>
    %c1_36 = arith.constant 1 : index
    %c0_37 = arith.constant 0 : index
    %c0_38 = arith.constant 0 : index
    %c0_39 = arith.constant 0 : index
    %29 = vector.load %arg2[%c1_36, %c0_37, %c0_38, %c0_39] : memref<9x3x128x128xf32, #tpu.memory_space<vmem>>, vector<1x1x128x128xf32>
    %30 = vector.shape_cast %29 : vector<1x1x128x128xf32> to vector<128x128xf32>
    %cst_40 = arith.constant dense<0.000000e+00> : vector<16x128xf32>
    %31 = tpu.matmul %28, %30, %cst_40 {dimension_numbers = #tpu.dot_dimension_numbers<[1], [0], [0], [1], [0, 0, 1, 1], [], []>} : vector<16x128xf32>, vector<128x128xf32>, vector<16x128xf32> -> vector<16x128xf32>
    %c1_41 = arith.constant 1 : index
    %c0_42 = arith.constant 0 : index
    %32 = vector.load %arg5[%c1_41, %c0_42] : memref<18x128xf32, #tpu.memory_space<vmem>>, vector<16x128xf32>
    %c1_43 = arith.constant 1 : index
    %c1_44 = arith.constant 1 : index
    %c0_45 = arith.constant 0 : index
    %c0_46 = arith.constant 0 : index
    %33 = vector.load %arg2[%c1_43, %c1_44, %c0_45, %c0_46] : memref<9x3x128x128xf32, #tpu.memory_space<vmem>>, vector<1x1x128x128xf32>
    %34 = vector.shape_cast %33 : vector<1x1x128x128xf32> to vector<128x128xf32>
    %cst_47 = arith.constant dense<0.000000e+00> : vector<16x128xf32>
    %35 = tpu.matmul %32, %34, %cst_47 {dimension_numbers = #tpu.dot_dimension_numbers<[1], [0], [0], [1], [0, 0, 1, 1], [], []>} : vector<16x128xf32>, vector<128x128xf32>, vector<16x128xf32> -> vector<16x128xf32>
    %36 = arith.addf %31, %35 : vector<16x128xf32>
    %c2_48 = arith.constant 2 : index
    %c0_49 = arith.constant 0 : index
    %37 = vector.load %arg5[%c2_48, %c0_49] : memref<18x128xf32, #tpu.memory_space<vmem>>, vector<16x128xf32>
    %c1_50 = arith.constant 1 : index
    %c2_51 = arith.constant 2 : index
    %c0_52 = arith.constant 0 : index
    %c0_53 = arith.constant 0 : index
    %38 = vector.load %arg2[%c1_50, %c2_51, %c0_52, %c0_53] : memref<9x3x128x128xf32, #tpu.memory_space<vmem>>, vector<1x1x128x128xf32>
    %39 = vector.shape_cast %38 : vector<1x1x128x128xf32> to vector<128x128xf32>
    %cst_54 = arith.constant dense<0.000000e+00> : vector<16x128xf32>
    %40 = tpu.matmul %37, %39, %cst_54 {dimension_numbers = #tpu.dot_dimension_numbers<[1], [0], [0], [1], [0, 0, 1, 1], [], []>} : vector<16x128xf32>, vector<128x128xf32>, vector<16x128xf32> -> vector<16x128xf32>
    %41 = arith.addf %36, %40 : vector<16x128xf32>
    %c1_55 = arith.constant 1 : index
    %c0_56 = arith.constant 0 : index
    %c0_57 = arith.constant 0 : index
    %42 = vector.load %arg3[%c1_55, %c0_56, %c0_57] : memref<9x1x128xf32, #tpu.memory_space<vmem>>, vector<1x1x128xf32>
    %43 = vector.shape_cast %42 : vector<1x1x128xf32> to vector<1x128xf32>
    %44 = vector.broadcast %43 : vector<1x128xf32> to vector<16x128xf32>
    %45 = arith.addf %41, %44 : vector<16x128xf32>
    %46 = arith.addf %45, %6 : vector<16x128xf32>
    %c1_58 = arith.constant 1 : index
    %c0_59 = arith.constant 0 : index
    %47 = vector.load %arg5[%c1_58, %c0_59] : memref<18x128xf32, #tpu.memory_space<vmem>>, vector<16x128xf32>
    tpu.vector_store %arg5[%c1_58, %c0_59], %46 {strides = array<i32>} : memref<18x128xf32, #tpu.memory_space<vmem>>, vector<16x128xf32>,
    %c1_60 = arith.constant 1 : index
    %c0_61 = arith.constant 0 : index
    %48 = vector.load %arg5[%c1_60, %c0_61] : memref<18x128xf32, #tpu.memory_space<vmem>>, vector<16x128xf32>
    %c0_62 = arith.constant 0 : index
    %c0_63 = arith.constant 0 : index
    %49 = vector.load %arg5[%c0_62, %c0_63] : memref<18x128xf32, #tpu.memory_space<vmem>>, vector<16x128xf32>
    %c2_64 = arith.constant 2 : index
    %c0_65 = arith.constant 0 : index
    %c0_66 = arith.constant 0 : index
    %c0_67 = arith.constant 0 : index
    %50 = vector.load %arg2[%c2_64, %c0_65, %c0_66, %c0_67] : memref<9x3x128x128xf32, #tpu.memory_space<vmem>>, vector<1x1x128x128xf32>
    %51 = vector.shape_cast %50 : vector<1x1x128x128xf32> to vector<128x128xf32>
    %cst_68 = arith.constant dense<0.000000e+00> : vector<16x128xf32>
    %52 = tpu.matmul %49, %51, %cst_68 {dimension_numbers = #tpu.dot_dimension_numbers<[1], [0], [0], [1], [0, 0, 1, 1], [], []>} : vector<16x128xf32>, vector<128x128xf32>, vector<16x128xf32> -> vector<16x128xf32>
    %c1_69 = arith.constant 1 : index
    %c0_70 = arith.constant 0 : index
    %53 = vector.load %arg5[%c1_69, %c0_70] : memref<18x128xf32, #tpu.memory_space<vmem>>, vector<16x128xf32>
    %c2_71 = arith.constant 2 : index
    %c1_72 = arith.constant 1 : index
    %c0_73 = arith.constant 0 : index
    %c0_74 = arith.constant 0 : index
    %54 = vector.load %arg2[%c2_71, %c1_72, %c0_73, %c0_74] : memref<9x3x128x128xf32, #tpu.memory_space<vmem>>, vector<1x1x128x128xf32>
    %55 = vector.shape_cast %54 : vector<1x1x128x128xf32> to vector<128x128xf32>
    %cst_75 = arith.constant dense<0.000000e+00> : vector<16x128xf32>
    %56 = tpu.matmul %53, %55, %cst_75 {dimension_numbers = #tpu.dot_dimension_numbers<[1], [0], [0], [1], [0, 0, 1, 1], [], []>} : vector<16x128xf32>, vector<128x128xf32>, vector<16x128xf32> -> vector<16x128xf32>
    %57 = arith.addf %52, %56 : vector<16x128xf32>
    %c2_76 = arith.constant 2 : index
    %c0_77 = arith.constant 0 : index
    %58 = vector.load %arg5[%c2_76, %c0_77] : memref<18x128xf32, #tpu.memory_space<vmem>>, vector<16x128xf32>
    %c2_78 = arith.constant 2 : index
    %c2_79 = arith.constant 2 : index
    %c0_80 = arith.constant 0 : index
    %c0_81 = arith.constant 0 : index
    %59 = vector.load %arg2[%c2_78, %c2_79, %c0_80, %c0_81] : memref<9x3x128x128xf32, #tpu.memory_space<vmem>>, vector<1x1x128x128xf32>
    %60 = vector.shape_cast %59 : vector<1x1x128x128xf32> to vector<128x128xf32>
    %cst_82 = arith.constant dense<0.000000e+00> : vector<16x128xf32>
    %61 = tpu.matmul %58, %60, %cst_82 {dimension_numbers = #tpu.dot_dimension_numbers<[1], [0], [0], [1], [0, 0, 1, 1], [], []>} : vector<16x128xf32>, vector<128x128xf32>, vector<16x128xf32> -> vector<16x128xf32>
    %62 = arith.addf %57, %61 : vector<16x128xf32>
    %c2_83 = arith.constant 2 : index
    %c0_84 = arith.constant 0 : index
    %c0_85 = arith.constant 0 : index
    %63 = vector.load %arg3[%c2_83, %c0_84, %c0_85] : memref<9x1x128xf32, #tpu.memory_space<vmem>>, vector<1x1x128xf32>
    %64 = vector.shape_cast %63 : vector<1x1x128xf32> to vector<1x128xf32>
    %65 = vector.broadcast %64 : vector<1x128xf32> to vector<16x128xf32>
    %66 = arith.addf %62, %65 : vector<16x128xf32>
    %cst_86 = arith.constant 0.000000e+00 : f32
    %67 = vector.broadcast %cst_86 : f32 to vector<16x128xf32>
    %68 = arith.maximumf %66, %67 : vector<16x128xf32>
    %c1_87 = arith.constant 1 : index
    %c0_88 = arith.constant 0 : index
    %69 = vector.load %arg5[%c1_87, %c0_88] : memref<18x128xf32, #tpu.memory_space<vmem>>, vector<16x128xf32>
    tpu.vector_store %arg5[%c1_87, %c0_88], %68 {strides = array<i32>} : memref<18x128xf32, #tpu.memory_space<vmem>>, vector<16x128xf32>,
    %c0_89 = arith.constant 0 : index
    %c0_90 = arith.constant 0 : index
    %70 = vector.load %arg5[%c0_89, %c0_90] : memref<18x128xf32, #tpu.memory_space<vmem>>, vector<16x128xf32>
    %c3 = arith.constant 3 : index
    %c0_91 = arith.constant 0 : index
    %c0_92 = arith.constant 0 : index
    %c0_93 = arith.constant 0 : index
    %71 = vector.load %arg2[%c3, %c0_91, %c0_92, %c0_93] : memref<9x3x128x128xf32, #tpu.memory_space<vmem>>, vector<1x1x128x128xf32>
    %72 = vector.shape_cast %71 : vector<1x1x128x128xf32> to vector<128x128xf32>
    %cst_94 = arith.constant dense<0.000000e+00> : vector<16x128xf32>
    %73 = tpu.matmul %70, %72, %cst_94 {dimension_numbers = #tpu.dot_dimension_numbers<[1], [0], [0], [1], [0, 0, 1, 1], [], []>} : vector<16x128xf32>, vector<128x128xf32>, vector<16x128xf32> -> vector<16x128xf32>
    %c1_95 = arith.constant 1 : index
    %c0_96 = arith.constant 0 : index
    %74 = vector.load %arg5[%c1_95, %c0_96] : memref<18x128xf32, #tpu.memory_space<vmem>>, vector<16x128xf32>
    %c3_97 = arith.constant 3 : index
    %c1_98 = arith.constant 1 : index
    %c0_99 = arith.constant 0 : index
    %c0_100 = arith.constant 0 : index
    %75 = vector.load %arg2[%c3_97, %c1_98, %c0_99, %c0_100] : memref<9x3x128x128xf32, #tpu.memory_space<vmem>>, vector<1x1x128x128xf32>
    %76 = vector.shape_cast %75 : vector<1x1x128x128xf32> to vector<128x128xf32>
    %cst_101 = arith.constant dense<0.000000e+00> : vector<16x128xf32>
    %77 = tpu.matmul %74, %76, %cst_101 {dimension_numbers = #tpu.dot_dimension_numbers<[1], [0], [0], [1], [0, 0, 1, 1], [], []>} : vector<16x128xf32>, vector<128x128xf32>, vector<16x128xf32> -> vector<16x128xf32>
    %78 = arith.addf %73, %77 : vector<16x128xf32>
    %c2_102 = arith.constant 2 : index
    %c0_103 = arith.constant 0 : index
    %79 = vector.load %arg5[%c2_102, %c0_103] : memref<18x128xf32, #tpu.memory_space<vmem>>, vector<16x128xf32>
    %c3_104 = arith.constant 3 : index
    %c2_105 = arith.constant 2 : index
    %c0_106 = arith.constant 0 : index
    %c0_107 = arith.constant 0 : index
    %80 = vector.load %arg2[%c3_104, %c2_105, %c0_106, %c0_107] : memref<9x3x128x128xf32, #tpu.memory_space<vmem>>, vector<1x1x128x128xf32>
    %81 = vector.shape_cast %80 : vector<1x1x128x128xf32> to vector<128x128xf32>
    %cst_108 = arith.constant dense<0.000000e+00> : vector<16x128xf32>
    %82 = tpu.matmul %79, %81, %cst_108 {dimension_numbers = #tpu.dot_dimension_numbers<[1], [0], [0], [1], [0, 0, 1, 1], [], []>} : vector<16x128xf32>, vector<128x128xf32>, vector<16x128xf32> -> vector<16x128xf32>
    %83 = arith.addf %78, %82 : vector<16x128xf32>
    %c3_109 = arith.constant 3 : index
    %c0_110 = arith.constant 0 : index
    %c0_111 = arith.constant 0 : index
    %84 = vector.load %arg3[%c3_109, %c0_110, %c0_111] : memref<9x1x128xf32, #tpu.memory_space<vmem>>, vector<1x1x128xf32>
    %85 = vector.shape_cast %84 : vector<1x1x128xf32> to vector<1x128xf32>
    %86 = vector.broadcast %85 : vector<1x128xf32> to vector<16x128xf32>
    %87 = arith.addf %83, %86 : vector<16x128xf32>
    %88 = arith.addf %87, %48 : vector<16x128xf32>
    %c1_112 = arith.constant 1 : index
    %c0_113 = arith.constant 0 : index
    %89 = vector.load %arg5[%c1_112, %c0_113] : memref<18x128xf32, #tpu.memory_space<vmem>>, vector<16x128xf32>
    tpu.vector_store %arg5[%c1_112, %c0_113], %88 {strides = array<i32>} : memref<18x128xf32, #tpu.memory_space<vmem>>, vector<16x128xf32>,
    %c1_114 = arith.constant 1 : index
    %c0_115 = arith.constant 0 : index
    %90 = vector.load %arg5[%c1_114, %c0_115] : memref<18x128xf32, #tpu.memory_space<vmem>>, vector<16x128xf32>
    %c0_116 = arith.constant 0 : index
    %c0_117 = arith.constant 0 : index
    %91 = vector.load %arg5[%c0_116, %c0_117] : memref<18x128xf32, #tpu.memory_space<vmem>>, vector<16x128xf32>
    %c4 = arith.constant 4 : index
    %c0_118 = arith.constant 0 : index
    %c0_119 = arith.constant 0 : index
    %c0_120 = arith.constant 0 : index
    %92 = vector.load %arg2[%c4, %c0_118, %c0_119, %c0_120] : memref<9x3x128x128xf32, #tpu.memory_space<vmem>>, vector<1x1x128x128xf32>
    %93 = vector.shape_cast %92 : vector<1x1x128x128xf32> to vector<128x128xf32>
    %cst_121 = arith.constant dense<0.000000e+00> : vector<16x128xf32>
    %94 = tpu.matmul %91, %93, %cst_121 {dimension_numbers = #tpu.dot_dimension_numbers<[1], [0], [0], [1], [0, 0, 1, 1], [], []>} : vector<16x128xf32>, vector<128x128xf32>, vector<16x128xf32> -> vector<16x128xf32>
    %c1_122 = arith.constant 1 : index
    %c0_123 = arith.constant 0 : index
    %95 = vector.load %arg5[%c1_122, %c0_123] : memref<18x128xf32, #tpu.memory_space<vmem>>, vector<16x128xf32>
    %c4_124 = arith.constant 4 : index
    %c1_125 = arith.constant 1 : index
    %c0_126 = arith.constant 0 : index
    %c0_127 = arith.constant 0 : index
    %96 = vector.load %arg2[%c4_124, %c1_125, %c0_126, %c0_127] : memref<9x3x128x128xf32, #tpu.memory_space<vmem>>, vector<1x1x128x128xf32>
    %97 = vector.shape_cast %96 : vector<1x1x128x128xf32> to vector<128x128xf32>
    %cst_128 = arith.constant dense<0.000000e+00> : vector<16x128xf32>
    %98 = tpu.matmul %95, %97, %cst_128 {dimension_numbers = #tpu.dot_dimension_numbers<[1], [0], [0], [1], [0, 0, 1, 1], [], []>} : vector<16x128xf32>, vector<128x128xf32>, vector<16x128xf32> -> vector<16x128xf32>
    %99 = arith.addf %94, %98 : vector<16x128xf32>
    %c2_129 = arith.constant 2 : index
    %c0_130 = arith.constant 0 : index
    %100 = vector.load %arg5[%c2_129, %c0_130] : memref<18x128xf32, #tpu.memory_space<vmem>>, vector<16x128xf32>
    %c4_131 = arith.constant 4 : index
    %c2_132 = arith.constant 2 : index
    %c0_133 = arith.constant 0 : index
    %c0_134 = arith.constant 0 : index
    %101 = vector.load %arg2[%c4_131, %c2_132, %c0_133, %c0_134] : memref<9x3x128x128xf32, #tpu.memory_space<vmem>>, vector<1x1x128x128xf32>
    %102 = vector.shape_cast %101 : vector<1x1x128x128xf32> to vector<128x128xf32>
    %cst_135 = arith.constant dense<0.000000e+00> : vector<16x128xf32>
    %103 = tpu.matmul %100, %102, %cst_135 {dimension_numbers = #tpu.dot_dimension_numbers<[1], [0], [0], [1], [0, 0, 1, 1], [], []>} : vector<16x128xf32>, vector<128x128xf32>, vector<16x128xf32> -> vector<16x128xf32>
    %104 = arith.addf %99, %103 : vector<16x128xf32>
    %c4_136 = arith.constant 4 : index
    %c0_137 = arith.constant 0 : index
    %c0_138 = arith.constant 0 : index
    %105 = vector.load %arg3[%c4_136, %c0_137, %c0_138] : memref<9x1x128xf32, #tpu.memory_space<vmem>>, vector<1x1x128xf32>
    %106 = vector.shape_cast %105 : vector<1x1x128xf32> to vector<1x128xf32>
    %107 = vector.broadcast %106 : vector<1x128xf32> to vector<16x128xf32>
    %108 = arith.addf %104, %107 : vector<16x128xf32>
    %cst_139 = arith.constant 0.000000e+00 : f32
    %109 = vector.broadcast %cst_139 : f32 to vector<16x128xf32>
    %110 = arith.maximumf %108, %109 : vector<16x128xf32>
    %c1_140 = arith.constant 1 : index
    %c0_141 = arith.constant 0 : index
    %111 = vector.load %arg5[%c1_140, %c0_141] : memref<18x128xf32, #tpu.memory_space<vmem>>, vector<16x128xf32>
    tpu.vector_store %arg5[%c1_140, %c0_141], %110 {strides = array<i32>} : memref<18x128xf32, #tpu.memory_space<vmem>>, vector<16x128xf32>,
    %c0_142 = arith.constant 0 : index
    %c0_143 = arith.constant 0 : index
    %112 = vector.load %arg5[%c0_142, %c0_143] : memref<18x128xf32, #tpu.memory_space<vmem>>, vector<16x128xf32>
    %c5 = arith.constant 5 : index
    %c0_144 = arith.constant 0 : index
    %c0_145 = arith.constant 0 : index
    %c0_146 = arith.constant 0 : index
    %113 = vector.load %arg2[%c5, %c0_144, %c0_145, %c0_146] : memref<9x3x128x128xf32, #tpu.memory_space<vmem>>, vector<1x1x128x128xf32>
    %114 = vector.shape_cast %113 : vector<1x1x128x128xf32> to vector<128x128xf32>
    %cst_147 = arith.constant dense<0.000000e+00> : vector<16x128xf32>
    %115 = tpu.matmul %112, %114, %cst_147 {dimension_numbers = #tpu.dot_dimension_numbers<[1], [0], [0], [1], [0, 0, 1, 1], [], []>} : vector<16x128xf32>, vector<128x128xf32>, vector<16x128xf32> -> vector<16x128xf32>
    %c1_148 = arith.constant 1 : index
    %c0_149 = arith.constant 0 : index
    %116 = vector.load %arg5[%c1_148, %c0_149] : memref<18x128xf32, #tpu.memory_space<vmem>>, vector<16x128xf32>
    %c5_150 = arith.constant 5 : index
    %c1_151 = arith.constant 1 : index
    %c0_152 = arith.constant 0 : index
    %c0_153 = arith.constant 0 : index
    %117 = vector.load %arg2[%c5_150, %c1_151, %c0_152, %c0_153] : memref<9x3x128x128xf32, #tpu.memory_space<vmem>>, vector<1x1x128x128xf32>
    %118 = vector.shape_cast %117 : vector<1x1x128x128xf32> to vector<128x128xf32>
    %cst_154 = arith.constant dense<0.000000e+00> : vector<16x128xf32>
    %119 = tpu.matmul %116, %118, %cst_154 {dimension_numbers = #tpu.dot_dimension_numbers<[1], [0], [0], [1], [0, 0, 1, 1], [], []>} : vector<16x128xf32>, vector<128x128xf32>, vector<16x128xf32> -> vector<16x128xf32>
    %120 = arith.addf %115, %119 : vector<16x128xf32>
    %c2_155 = arith.constant 2 : index
    %c0_156 = arith.constant 0 : index
    %121 = vector.load %arg5[%c2_155, %c0_156] : memref<18x128xf32, #tpu.memory_space<vmem>>, vector<16x128xf32>
    %c5_157 = arith.constant 5 : index
    %c2_158 = arith.constant 2 : index
    %c0_159 = arith.constant 0 : index
    %c0_160 = arith.constant 0 : index
    %122 = vector.load %arg2[%c5_157, %c2_158, %c0_159, %c0_160] : memref<9x3x128x128xf32, #tpu.memory_space<vmem>>, vector<1x1x128x128xf32>
    %123 = vector.shape_cast %122 : vector<1x1x128x128xf32> to vector<128x128xf32>
    %cst_161 = arith.constant dense<0.000000e+00> : vector<16x128xf32>
    %124 = tpu.matmul %121, %123, %cst_161 {dimension_numbers = #tpu.dot_dimension_numbers<[1], [0], [0], [1], [0, 0, 1, 1], [], []>} : vector<16x128xf32>, vector<128x128xf32>, vector<16x128xf32> -> vector<16x128xf32>
    %125 = arith.addf %120, %124 : vector<16x128xf32>
    %c5_162 = arith.constant 5 : index
    %c0_163 = arith.constant 0 : index
    %c0_164 = arith.constant 0 : index
    %126 = vector.load %arg3[%c5_162, %c0_163, %c0_164] : memref<9x1x128xf32, #tpu.memory_space<vmem>>, vector<1x1x128xf32>
    %127 = vector.shape_cast %126 : vector<1x1x128xf32> to vector<1x128xf32>
    %128 = vector.broadcast %127 : vector<1x128xf32> to vector<16x128xf32>
    %129 = arith.addf %125, %128 : vector<16x128xf32>
    %130 = arith.addf %129, %90 : vector<16x128xf32>
    %c1_165 = arith.constant 1 : index
    %c0_166 = arith.constant 0 : index
    %131 = vector.load %arg5[%c1_165, %c0_166] : memref<18x128xf32, #tpu.memory_space<vmem>>, vector<16x128xf32>
    tpu.vector_store %arg5[%c1_165, %c0_166], %130 {strides = array<i32>} : memref<18x128xf32, #tpu.memory_space<vmem>>, vector<16x128xf32>,
    %c1_167 = arith.constant 1 : index
    %c0_168 = arith.constant 0 : index
    %132 = vector.load %arg5[%c1_167, %c0_168] : memref<18x128xf32, #tpu.memory_space<vmem>>, vector<16x128xf32>
    %c0_169 = arith.constant 0 : index
    %c0_170 = arith.constant 0 : index
    %133 = vector.load %arg5[%c0_169, %c0_170] : memref<18x128xf32, #tpu.memory_space<vmem>>, vector<16x128xf32>
    %c6 = arith.constant 6 : index
    %c0_171 = arith.constant 0 : index
    %c0_172 = arith.constant 0 : index
    %c0_173 = arith.constant 0 : index
    %134 = vector.load %arg2[%c6, %c0_171, %c0_172, %c0_173] : memref<9x3x128x128xf32, #tpu.memory_space<vmem>>, vector<1x1x128x128xf32>
    %135 = vector.shape_cast %134 : vector<1x1x128x128xf32> to vector<128x128xf32>
    %cst_174 = arith.constant dense<0.000000e+00> : vector<16x128xf32>
    %136 = tpu.matmul %133, %135, %cst_174 {dimension_numbers = #tpu.dot_dimension_numbers<[1], [0], [0], [1], [0, 0, 1, 1], [], []>} : vector<16x128xf32>, vector<128x128xf32>, vector<16x128xf32> -> vector<16x128xf32>
    %c1_175 = arith.constant 1 : index
    %c0_176 = arith.constant 0 : index
    %137 = vector.load %arg5[%c1_175, %c0_176] : memref<18x128xf32, #tpu.memory_space<vmem>>, vector<16x128xf32>
    %c6_177 = arith.constant 6 : index
    %c1_178 = arith.constant 1 : index
    %c0_179 = arith.constant 0 : index
    %c0_180 = arith.constant 0 : index
    %138 = vector.load %arg2[%c6_177, %c1_178, %c0_179, %c0_180] : memref<9x3x128x128xf32, #tpu.memory_space<vmem>>, vector<1x1x128x128xf32>
    %139 = vector.shape_cast %138 : vector<1x1x128x128xf32> to vector<128x128xf32>
    %cst_181 = arith.constant dense<0.000000e+00> : vector<16x128xf32>
    %140 = tpu.matmul %137, %139, %cst_181 {dimension_numbers = #tpu.dot_dimension_numbers<[1], [0], [0], [1], [0, 0, 1, 1], [], []>} : vector<16x128xf32>, vector<128x128xf32>, vector<16x128xf32> -> vector<16x128xf32>
    %141 = arith.addf %136, %140 : vector<16x128xf32>
    %c2_182 = arith.constant 2 : index
    %c0_183 = arith.constant 0 : index
    %142 = vector.load %arg5[%c2_182, %c0_183] : memref<18x128xf32, #tpu.memory_space<vmem>>, vector<16x128xf32>
    %c6_184 = arith.constant 6 : index
    %c2_185 = arith.constant 2 : index
    %c0_186 = arith.constant 0 : index
    %c0_187 = arith.constant 0 : index
    %143 = vector.load %arg2[%c6_184, %c2_185, %c0_186, %c0_187] : memref<9x3x128x128xf32, #tpu.memory_space<vmem>>, vector<1x1x128x128xf32>
    %144 = vector.shape_cast %143 : vector<1x1x128x128xf32> to vector<128x128xf32>
    %cst_188 = arith.constant dense<0.000000e+00> : vector<16x128xf32>
    %145 = tpu.matmul %142, %144, %cst_188 {dimension_numbers = #tpu.dot_dimension_numbers<[1], [0], [0], [1], [0, 0, 1, 1], [], []>} : vector<16x128xf32>, vector<128x128xf32>, vector<16x128xf32> -> vector<16x128xf32>
    %146 = arith.addf %141, %145 : vector<16x128xf32>
    %c6_189 = arith.constant 6 : index
    %c0_190 = arith.constant 0 : index
    %c0_191 = arith.constant 0 : index
    %147 = vector.load %arg3[%c6_189, %c0_190, %c0_191] : memref<9x1x128xf32, #tpu.memory_space<vmem>>, vector<1x1x128xf32>
    %148 = vector.shape_cast %147 : vector<1x1x128xf32> to vector<1x128xf32>
    %149 = vector.broadcast %148 : vector<1x128xf32> to vector<16x128xf32>
    %150 = arith.addf %146, %149 : vector<16x128xf32>
    %cst_192 = arith.constant 0.000000e+00 : f32
    %151 = vector.broadcast %cst_192 : f32 to vector<16x128xf32>
    %152 = arith.maximumf %150, %151 : vector<16x128xf32>
    %c1_193 = arith.constant 1 : index
    %c0_194 = arith.constant 0 : index
    %153 = vector.load %arg5[%c1_193, %c0_194] : memref<18x128xf32, #tpu.memory_space<vmem>>, vector<16x128xf32>
    tpu.vector_store %arg5[%c1_193, %c0_194], %152 {strides = array<i32>} : memref<18x128xf32, #tpu.memory_space<vmem>>, vector<16x128xf32>,
    %c0_195 = arith.constant 0 : index
    %c0_196 = arith.constant 0 : index
    %154 = vector.load %arg5[%c0_195, %c0_196] : memref<18x128xf32, #tpu.memory_space<vmem>>, vector<16x128xf32>
    %c7 = arith.constant 7 : index
    %c0_197 = arith.constant 0 : index
    %c0_198 = arith.constant 0 : index
    %c0_199 = arith.constant 0 : index
    %155 = vector.load %arg2[%c7, %c0_197, %c0_198, %c0_199] : memref<9x3x128x128xf32, #tpu.memory_space<vmem>>, vector<1x1x128x128xf32>
    %156 = vector.shape_cast %155 : vector<1x1x128x128xf32> to vector<128x128xf32>
    %cst_200 = arith.constant dense<0.000000e+00> : vector<16x128xf32>
    %157 = tpu.matmul %154, %156, %cst_200 {dimension_numbers = #tpu.dot_dimension_numbers<[1], [0], [0], [1], [0, 0, 1, 1], [], []>} : vector<16x128xf32>, vector<128x128xf32>, vector<16x128xf32> -> vector<16x128xf32>
    %c1_201 = arith.constant 1 : index
    %c0_202 = arith.constant 0 : index
    %158 = vector.load %arg5[%c1_201, %c0_202] : memref<18x128xf32, #tpu.memory_space<vmem>>, vector<16x128xf32>
    %c7_203 = arith.constant 7 : index
    %c1_204 = arith.constant 1 : index
    %c0_205 = arith.constant 0 : index
    %c0_206 = arith.constant 0 : index
    %159 = vector.load %arg2[%c7_203, %c1_204, %c0_205, %c0_206] : memref<9x3x128x128xf32, #tpu.memory_space<vmem>>, vector<1x1x128x128xf32>
    %160 = vector.shape_cast %159 : vector<1x1x128x128xf32> to vector<128x128xf32>
    %cst_207 = arith.constant dense<0.000000e+00> : vector<16x128xf32>
    %161 = tpu.matmul %158, %160, %cst_207 {dimension_numbers = #tpu.dot_dimension_numbers<[1], [0], [0], [1], [0, 0, 1, 1], [], []>} : vector<16x128xf32>, vector<128x128xf32>, vector<16x128xf32> -> vector<16x128xf32>
    %162 = arith.addf %157, %161 : vector<16x128xf32>
    %c2_208 = arith.constant 2 : index
    %c0_209 = arith.constant 0 : index
    %163 = vector.load %arg5[%c2_208, %c0_209] : memref<18x128xf32, #tpu.memory_space<vmem>>, vector<16x128xf32>
    %c7_210 = arith.constant 7 : index
    %c2_211 = arith.constant 2 : index
    %c0_212 = arith.constant 0 : index
    %c0_213 = arith.constant 0 : index
    %164 = vector.load %arg2[%c7_210, %c2_211, %c0_212, %c0_213] : memref<9x3x128x128xf32, #tpu.memory_space<vmem>>, vector<1x1x128x128xf32>
    %165 = vector.shape_cast %164 : vector<1x1x128x128xf32> to vector<128x128xf32>
    %cst_214 = arith.constant dense<0.000000e+00> : vector<16x128xf32>
    %166 = tpu.matmul %163, %165, %cst_214 {dimension_numbers = #tpu.dot_dimension_numbers<[1], [0], [0], [1], [0, 0, 1, 1], [], []>} : vector<16x128xf32>, vector<128x128xf32>, vector<16x128xf32> -> vector<16x128xf32>
    %167 = arith.addf %162, %166 : vector<16x128xf32>
    %c7_215 = arith.constant 7 : index
    %c0_216 = arith.constant 0 : index
    %c0_217 = arith.constant 0 : index
    %168 = vector.load %arg3[%c7_215, %c0_216, %c0_217] : memref<9x1x128xf32, #tpu.memory_space<vmem>>, vector<1x1x128xf32>
    %169 = vector.shape_cast %168 : vector<1x1x128xf32> to vector<1x128xf32>
    %170 = vector.broadcast %169 : vector<1x128xf32> to vector<16x128xf32>
    %171 = arith.addf %167, %170 : vector<16x128xf32>
    %172 = arith.addf %171, %132 : vector<16x128xf32>
    %c1_218 = arith.constant 1 : index
    %c0_219 = arith.constant 0 : index
    %173 = vector.load %arg5[%c1_218, %c0_219] : memref<18x128xf32, #tpu.memory_space<vmem>>, vector<16x128xf32>
    tpu.vector_store %arg5[%c1_218, %c0_219], %172 {strides = array<i32>} : memref<18x128xf32, #tpu.memory_space<vmem>>, vector<16x128xf32>,
    %c0_220 = arith.constant 0 : index
    %c0_221 = arith.constant 0 : index
    %174 = vector.load %arg5[%c0_220, %c0_221] : memref<18x128xf32, #tpu.memory_space<vmem>>, vector<16x128xf32>
    %c8 = arith.constant 8 : index
    %c0_222 = arith.constant 0 : index
    %c0_223 = arith.constant 0 : index
    %c0_224 = arith.constant 0 : index
    %175 = vector.load %arg2[%c8, %c0_222, %c0_223, %c0_224] : memref<9x3x128x128xf32, #tpu.memory_space<vmem>>, vector<1x1x128x128xf32>
    %176 = vector.shape_cast %175 : vector<1x1x128x128xf32> to vector<128x128xf32>
    %cst_225 = arith.constant dense<0.000000e+00> : vector<16x128xf32>
    %177 = tpu.matmul %174, %176, %cst_225 {dimension_numbers = #tpu.dot_dimension_numbers<[1], [0], [0], [1], [0, 0, 1, 1], [], []>} : vector<16x128xf32>, vector<128x128xf32>, vector<16x128xf32> -> vector<16x128xf32>
    %c1_226 = arith.constant 1 : index
    %c0_227 = arith.constant 0 : index
    %178 = vector.load %arg5[%c1_226, %c0_227] : memref<18x128xf32, #tpu.memory_space<vmem>>, vector<16x128xf32>
    %c8_228 = arith.constant 8 : index
    %c1_229 = arith.constant 1 : index
    %c0_230 = arith.constant 0 : index
    %c0_231 = arith.constant 0 : index
    %179 = vector.load %arg2[%c8_228, %c1_229, %c0_230, %c0_231] : memref<9x3x128x128xf32, #tpu.memory_space<vmem>>, vector<1x1x128x128xf32>
    %180 = vector.shape_cast %179 : vector<1x1x128x128xf32> to vector<128x128xf32>
    %cst_232 = arith.constant dense<0.000000e+00> : vector<16x128xf32>
    %181 = tpu.matmul %178, %180, %cst_232 {dimension_numbers = #tpu.dot_dimension_numbers<[1], [0], [0], [1], [0, 0, 1, 1], [], []>} : vector<16x128xf32>, vector<128x128xf32>, vector<16x128xf32> -> vector<16x128xf32>
    %182 = arith.addf %177, %181 : vector<16x128xf32>
    %c2_233 = arith.constant 2 : index
    %c0_234 = arith.constant 0 : index
    %183 = vector.load %arg5[%c2_233, %c0_234] : memref<18x128xf32, #tpu.memory_space<vmem>>, vector<16x128xf32>
    %c8_235 = arith.constant 8 : index
    %c2_236 = arith.constant 2 : index
    %c0_237 = arith.constant 0 : index
    %c0_238 = arith.constant 0 : index
    %184 = vector.load %arg2[%c8_235, %c2_236, %c0_237, %c0_238] : memref<9x3x128x128xf32, #tpu.memory_space<vmem>>, vector<1x1x128x128xf32>
    %185 = vector.shape_cast %184 : vector<1x1x128x128xf32> to vector<128x128xf32>
    %cst_239 = arith.constant dense<0.000000e+00> : vector<16x128xf32>
    %186 = tpu.matmul %183, %185, %cst_239 {dimension_numbers = #tpu.dot_dimension_numbers<[1], [0], [0], [1], [0, 0, 1, 1], [], []>} : vector<16x128xf32>, vector<128x128xf32>, vector<16x128xf32> -> vector<16x128xf32>
    %187 = arith.addf %182, %186 : vector<16x128xf32>
    %c8_240 = arith.constant 8 : index
    %c0_241 = arith.constant 0 : index
    %c0_242 = arith.constant 0 : index
    %188 = vector.load %arg3[%c8_240, %c0_241, %c0_242] : memref<9x1x128xf32, #tpu.memory_space<vmem>>, vector<1x1x128xf32>
    %189 = vector.shape_cast %188 : vector<1x1x128xf32> to vector<1x128xf32>
    %190 = vector.broadcast %189 : vector<1x128xf32> to vector<16x128xf32>
    %191 = arith.addf %187, %190 : vector<16x128xf32>
    %cst_243 = arith.constant 2.000000e-01 : f32
    %192 = vector.broadcast %cst_243 : f32 to vector<16x128xf32>
    %193 = arith.mulf %192, %191 : vector<16x128xf32>
    %c0_244 = arith.constant 0 : index
    %c0_245 = arith.constant 0 : index
    %c0_246 = arith.constant 0 : index
    %194 = vector.load %arg1[%c0_244, %c0_245, %c0_246] : memref<1x16x128xf32, #tpu.memory_space<vmem>>, vector<1x16x128xf32>
    %195 = vector.shape_cast %194 : vector<1x16x128xf32> to vector<16x128xf32>
    %196 = arith.addf %193, %195 : vector<16x128xf32>
    %c0_247 = arith.constant 0 : index
    %c0_248 = arith.constant 0 : index
    %c0_249 = arith.constant 0 : index
    %197 = vector.load %arg4[%c0_247, %c0_248, %c0_249] : memref<1x16x128xf32, #tpu.memory_space<vmem>>, vector<1x16x128xf32>
    %198 = vector.shape_cast %197 : vector<1x16x128xf32> to vector<16x128xf32>
    %199 = vector.shape_cast %196 : vector<16x128xf32> to vector<1x16x128xf32>
    tpu.vector_store %arg4[%c0_247, %c0_248, %c0_249], %199 {strides = array<i32>} : memref<1x16x128xf32, #tpu.memory_space<vmem>>, vector<1x16x128xf32>,
    return
  }
  func.func @transform_0(%arg0: i32) -> (i32, i32, i32) {
    %c0_i32 = arith.constant 0 : i32
    %c0_i32_0 = arith.constant 0 : i32
    %c0_i32_1 = arith.constant 0 : i32
    return %arg0, %c0_i32, %c0_i32_0 : i32, i32, i32
  }
  func.func @transform_1(%arg0: i32) -> (i32, i32, i32, i32) {
    %c0_i32 = arith.constant 0 : i32
    %c0_i32_0 = arith.constant 0 : i32
    %c0_i32_1 = arith.constant 0 : i32
    %c0_i32_2 = arith.constant 0 : i32
    %c0_i32_3 = arith.constant 0 : i32
    return %c0_i32, %c0_i32_0, %c0_i32_1, %c0_i32_2 : i32, i32, i32, i32
  }
  func.func @transform_2(%arg0: i32) -> (i32, i32, i32) {
    %c0_i32 = arith.constant 0 : i32
    %c0_i32_0 = arith.constant 0 : i32
    %c0_i32_1 = arith.constant 0 : i32
    %c0_i32_2 = arith.constant 0 : i32
    return %c0_i32, %c0_i32_0, %c0_i32_1 : i32, i32, i32
  }
  func.func @transform_3(%arg0: i32) -> (i32, i32, i32) {
    %c0_i32 = arith.constant 0 : i32
    %c0_i32_0 = arith.constant 0 : i32
    %c0_i32_1 = arith.constant 0 : i32
    return %arg0, %c0_i32, %c0_i32_0 : i32, i32, i32
  }
}

</mosaic_0001>

<llo_original>
// kernel: rg_forward.1
$region0: #{rg_forward.1}
  #allocation0 [shape = 'u32[]', space=smem, size = 0x4, offset = 0x4, fixed_abs, tag = 'smem constant byte address 0x4 - core index']
  #allocation1 [shape = 'u32[72,128]{1,0:T(1,128)}', space=vmem, size = 0x9000, scoped, tag = 'internal scratch']
  #allocation2 [shape = 'f32[18,128]{1,0:T(8,128)}', space=vmem, size = 0x3000, scoped, tag = 'scratch operand']
  %s0 = inlined_call_operand.vmem [shape: f32[2,16,128], index: 0, kind: input, shape index: {}]
  %s1 = inlined_call_operand.vmem [shape: f32[9,3,128,128], index: 1, kind: input, shape index: {}]
  %s2 = inlined_call_operand.vmem [shape: f32[9,1,128], index: 2, kind: input, shape index: {}]
  %s3 = inlined_call_operand.vmem [shape: f32[2,16,128], index: 3, kind: output, shape index: {}]
  %s4 = sld [smem:[#allocation0]]
  $region45: #{rg_forward.1} parent=0
    _
  %s6 = ssub.s32 1, %s4
  %s7 = scalar_select 0, %s6, %s4
  loop: start=0, step=1, limit=4
  $region2: #{rg_forward.1} parent=0 // loop_pre_header
    _
  $region3: #{rg_forward.1} parent=0 // loop_header
    %s9 = sphi 0, %s13
    %p10 = scmp.ge.s32.totalorder %s9, 4
    %s19 = sphi 0, %s21
    %s22 = sphi 0, %s19
    %s23 = sphi 0, %s22
    %s39 = sphi 0, %s23
    %s43 = sphi 0, %s43
    %s45 = sphi 0, %s43
    %s46 = sphi 0, %s45
    %s60 = sphi 0, %s46
    %s64 = sphi 0, %s64
    %s66 = sphi 0, %s64
    %s67 = sphi 0, %s66
    %s81 = sphi 0, %s67
    %s87 = sphi 0, %s89
    %s90 = sphi 0, %s87
    %s91 = sphi 0, %s90
    %s107 = sphi 0, %s91
  $region4: #{rg_forward.1} parent=0 // loop_header_branch
    %12 = sbr.rel (%p10) target = $region8
  $region5: #{rg_forward.1} parent=0 // loop_body
    %s14 = ssub.s32 %s9, 1
    %s15 = ssub.s32 %s9, 2
    %s16 = sadd.s32 %s9, 1
    %s17 = ssub.s32 %s9, %s16
    %p18 = scmp.eq.s32.totalorder %s17, 0
    %s20 = sadd.s32 %s19, 1
    %s21 = scalar_select %p18, %s19, %s20
    %p24 = pneg %p18
    %p25 = scmp.eq.s32.totalorder %s9, 1
    %p26 = por %p24, %p25
    %p27 = scmp.ne.s32.totalorder %s19, %s22
    %p28 = scmp.eq.s32.totalorder %s9, 0
    %p29 = por %p27, %p28
    %p30 = scmp.ne.s32.totalorder %s19, %s22
    %p31 = scmp.eq.s32.totalorder %s14, 1
    %p32 = por %p30, %p31
    %p33 = scmp.ne.s32.totalorder %s22, %s23
    %p34 = scmp.eq.s32.totalorder %s14, 0
    %p35 = por %p33, %p34
    %p36 = scmp.ne.s32.totalorder %s22, %s23
    %p37 = scmp.eq.s32.totalorder %s15, 1
    %p38 = por %p36, %p37
    %p40 = scmp.ne.s32.totalorder %s23, %s39
    %p41 = scmp.eq.s32.totalorder %s15, 0
    %p42 = por %p40, %p41
    %s44 = sadd.s32 %s43, 1
    %p47 = scmp.eq.s32.totalorder %s9, 1
    %p48 = scmp.ne.s32.totalorder %s43, %s45
    %p49 = scmp.eq.s32.totalorder %s9, 0
    %p50 = por %p48, %p49
    %p51 = scmp.ne.s32.totalorder %s43, %s45
    %p52 = scmp.eq.s32.totalorder %s14, 1
    %p53 = por %p51, %p52
    %p54 = scmp.ne.s32.totalorder %s45, %s46
    %p55 = scmp.eq.s32.totalorder %s14, 0
    %p56 = por %p54, %p55
    %p57 = scmp.ne.s32.totalorder %s45, %s46
    %p58 = scmp.eq.s32.totalorder %s15, 1
    %p59 = por %p57, %p58
    %p61 = scmp.ne.s32.totalorder %s46, %s60
    %p62 = scmp.eq.s32.totalorder %s15, 0
    %p63 = por %p61, %p62
    %s65 = sadd.s32 %s64, 1
    %p68 = scmp.eq.s32.totalorder %s9, 1
    %p69 = scmp.ne.s32.totalorder %s64, %s66
    %p70 = scmp.eq.s32.totalorder %s9, 0
    %p71 = por %p69, %p70
    %p72 = scmp.ne.s32.totalorder %s64, %s66
    %p73 = scmp.eq.s32.totalorder %s14, 1
    %p74 = por %p72, %p73
    %p75 = scmp.ne.s32.totalorder %s66, %s67
    %p76 = scmp.eq.s32.totalorder %s14, 0
    %p77 = por %p75, %p76
    %p78 = scmp.ne.s32.totalorder %s66, %s67
    %p79 = scmp.eq.s32.totalorder %s15, 1
    %p80 = por %p78, %p79
    %p82 = scmp.ne.s32.totalorder %s67, %s81
    %p83 = scmp.eq.s32.totalorder %s15, 0
    %p84 = por %p82, %p83
    %s85 = ssub.s32 %s9, %s16
    %p86 = scmp.eq.s32.totalorder %s85, 0
    %s88 = sadd.s32 %s87, 1
    %s89 = scalar_select %p86, %s87, %s88
    %p92 = pneg %p86
    %p93 = scmp.eq.s32.totalorder %s9, 1
    %p94 = por %p92, %p93
    %p95 = scmp.ne.s32.totalorder %s87, %s90
    %p96 = scmp.eq.s32.totalorder %s9, 0
    %p97 = por %p95, %p96
    %p98 = scmp.ne.s32.totalorder %s87, %s90
    %p99 = scmp.eq.s32.totalorder %s14, 1
    %p100 = por %p98, %p99
    %p101 = scmp.ne.s32.totalorder %s90, %s91
    %p102 = scmp.eq.s32.totalorder %s14, 0
    %p103 = por %p101, %p102
    %p104 = scmp.ne.s32.totalorder %s90, %s91
    %p105 = scmp.eq.s32.totalorder %s15, 1
    %p106 = por %p104, %p105
    %p108 = scmp.ne.s32.totalorder %s91, %s107
    %p109 = scmp.eq.s32.totalorder %s15, 0
    %p110 = por %p108, %p109
    %p111 = scmp.le.s32.totalorder 1, %s9
    %p112 = scmp.lt.s32.totalorder %s9, 3
    %p113 = pnand %p111, %p112
    %p114 = pneg %p113
    // Predicated region
    $region9: #{rg_forward.1} parent=5 // pred_check
      _
    $region10: #{rg_forward.1} parent=5 // pred_check_branch
      %116 = sbr.rel (%p113) target = $region12
    $region11: #{rg_forward.1} parent=5 // pred_region
      %s117 = ssub.s32 %s9, 1
      // Predicated region
      $region13: #{rg_forward.1} parent=11 // pred_check
        %p118 = pneg %p56
      $region14: #{rg_forward.1} parent=11 // pred_check_branch
        %120 = sbr.rel (%p118) target = $region16
      $region15: #{rg_forward.1} parent=11 // pred_region
        _
      $region16: #{rg_forward.1} parent=11 // pred_fallthru
        _
      // Predicated region
      $region17: #{rg_forward.1} parent=11 // pred_check
        %p121 = pneg %p77
      $region18: #{rg_forward.1} parent=11 // pred_check_branch
        %123 = sbr.rel (%p121) target = $region20
      $region19: #{rg_forward.1} parent=11 // pred_region
        _
      $region20: #{rg_forward.1} parent=11 // pred_fallthru
        _
    $region12: #{rg_forward.1} parent=5 // pred_fallthru
      _
    %p124 = scmp.lt.s32.totalorder %s9, 2
    // Predicated region
    $region21: #{rg_forward.1} parent=5 // pred_check
      %p125 = pneg %p124
    $region22: #{rg_forward.1} parent=5 // pred_check_branch
      %127 = sbr.rel (%p125) target = $region24
    $region23: #{rg_forward.1} parent=5 // pred_region
      // Predicated region
      $region25: #{rg_forward.1} parent=23 // pred_check
        %p128 = pneg %p29
      $region26: #{rg_forward.1} parent=23 // pred_check_branch
        %130 = sbr.rel (%p128) target = $region28
      $region27: #{rg_forward.1} parent=23 // pred_region
        %p131 = scmp.lt.s32.totalorder %s9, 1
        %s132 = scalar_select %p131, %s9, 1
        %s133 = smul.addr %s132, 2
        %s134 = smul.addr %s133, 8
        %s135 = scalar_lea.vmem %s0, %s134
      $region28: #{rg_forward.1} parent=23 // pred_fallthru
        _
    $region24: #{rg_forward.1} parent=5 // pred_fallthru
      _
    %p136 = scmp.le.s32.totalorder 1, %s9
    %p137 = scmp.lt.s32.totalorder %s9, 3
    %p138 = pnand %p136, %p137
    %p139 = pneg %p138
    // Predicated region
    $region29: #{rg_forward.1} parent=5 // pred_check
      _
    $region30: #{rg_forward.1} parent=5 // pred_check_branch
      %141 = sbr.rel (%p138) target = $region32
    $region31: #{rg_forward.1} parent=5 // pred_region
      %s142 = ssub.s32 %s9, 1
      %p143 = scmp.lt.s32.totalorder %s14, 1
      %s144 = scalar_select %p143, %s14, 1
      %s145 = smul.addr %s144, 2
      %s146 = smul.addr %s145, 8
      %s147 = scalar_lea.vmem %s0, %s146
      %p148 = pneg %p35
      %p149 = pneg %p32
      %p150 = pneg %p56
      %p151 = pneg %p53
      %p152 = pneg %p77
      %p153 = pneg %p74
      %p154 = pneg %p103
      %p155 = pneg %p100
      %p156 = scmp.lt.s32.totalorder %s14, 1
      %s157 = scalar_select %p156, %s14, 1
      %s158 = smul.addr %s157, 2
      %s159 = smul.addr %s158, 8
      %s160 = scalar_lea.vmem %s3, %s159
      %p161 = scmp.lt.s32.totalorder %s14, 1
      %s162 = scalar_select %p161, %s14, 1
      %s163 = smul.addr %s162, 2
      %s164 = smul.addr %s163, 8
      %s165 = scalar_lea.vmem %s0, %s164
      %p166 = scmp.lt.s32.totalorder %s14, 1
      %s167 = scalar_select %p166, %s14, 1
      %s168 = smul.addr %s167, 2
      %s169 = smul.addr %s168, 8
      %s170 = scalar_lea.vmem %s3, %s169
      %171 = vst [vmem:[#allocation2] sm:$0x1] 0.0
      %172 = vst [vmem:[#allocation2 + $0x11] sm:$0x1] 0.0
      %v173 = vld [vmem:[%s165] sm:$0xff]
      %v174 = vld [vmem:[%s165 + $0x8] sm:$0xff]
      %175 = vst [vmem:[#allocation2 + $0x1] sm:$0xff] %v173
      %176 = vst [vmem:[#allocation2 + $0x9] sm:$0xff] %v174
      %v177 = vld [vmem:[#allocation2 + $0x1] sm:$0xff]
      %v178 = vld [vmem:[#allocation2 + $0x9] sm:$0xff]
      %v179 = vld [vmem:[#allocation2] sm:$0xff]
      %v180 = vld [vmem:[#allocation2 + $0x8] sm:$0xff]
      %v181 = vld [vmem:[%s1] sm:$0xff]
      %v182 = vld [vmem:[%s1 + $0x8] sm:$0xff]
      %v183 = vld [vmem:[%s1 + $0x10] sm:$0xff]
      %v184 = vld [vmem:[%s1 + $0x18] sm:$0xff]
      %v185 = vld [vmem:[%s1 + $0x20] sm:$0xff]
      %v186 = vld [vmem:[%s1 + $0x28] sm:$0xff]
      %v187 = vld [vmem:[%s1 + $0x30] sm:$0xff]
      %v188 = vld [vmem:[%s1 + $0x38] sm:$0xff]
      %v189 = vld [vmem:[%s1 + $0x40] sm:$0xff]
      %v190 = vld [vmem:[%s1 + $0x48] sm:$0xff]
      %v191 = vld [vmem:[%s1 + $0x50] sm:$0xff]
      %v192 = vld [vmem:[%s1 + $0x58] sm:$0xff]
      %v193 = vld [vmem:[%s1 + $0x60] sm:$0xff]
      %v194 = vld [vmem:[%s1 + $0x68] sm:$0xff]
      %v195 = vld [vmem:[%s1 + $0x70] sm:$0xff]
      %v196 = vld [vmem:[%s1 + $0x78] sm:$0xff]
      %s197 = scalar_lea.vmem %s1, 128
      %v198 = vld [vmem:[%s197] sm:$0xff]
      %v199 = vld [vmem:[%s197 + $0x8] sm:$0xff]
      %v200 = vld [vmem:[%s197 + $0x10] sm:$0xff]
      %v201 = vld [vmem:[%s197 + $0x18] sm:$0xff]
      %v202 = vld [vmem:[%s197 + $0x20] sm:$0xff]
      %v203 = vld [vmem:[%s197 + $0x28] sm:$0xff]
      %v204 = vld [vmem:[%s197 + $0x30] sm:$0xff]
      %v205 = vld [vmem:[%s197 + $0x38] sm:$0xff]
      %v206 = vld [vmem:[%s197 + $0x40] sm:$0xff]
      %v207 = vld [vmem:[%s197 + $0x48] sm:$0xff]
      %v208 = vld [vmem:[%s197 + $0x50] sm:$0xff]
      %v209 = vld [vmem:[%s197 + $0x58] sm:$0xff]
      %v210 = vld [vmem:[%s197 + $0x60] sm:$0xff]
      %v211 = vld [vmem:[%s197 + $0x68] sm:$0xff]
      %v212 = vld [vmem:[%s197 + $0x70] sm:$0xff]
      %v213 = vld [vmem:[%s197 + $0x78] sm:$0xff]
      %214 = vmatpush.msra.mxu0 %v213
      %215 = vmatpush.msra.mxu0 %v212
      %216 = vmatpush.msra.mxu0 %v211
      %217 = vmatpush.msra.mxu0 %v210
      %218 = vmatpush.msra.mxu0 %v209
      %219 = vmatpush.msra.mxu0 %v208
      %220 = vmatpush.msra.mxu0 %v207
      %221 = vmatpush.msra.mxu0 %v206
      %222 = vmatpush.msra.mxu0 %v205
      %223 = vmatpush.msra.mxu0 %v204
      %224 = vmatpush.msra.mxu0 %v203
      %225 = vmatpush.msra.mxu0 %v202
      %226 = vmatpush.msra.mxu0 %v201
      %227 = vmatpush.msra.mxu0 %v200
      %228 = vmatpush.msra.mxu0 %v199
      %229 = vmatpush.msra.mxu0 %v198
      %230 = vmatmul.f32.gmra.mxu0 %v177
      %v231 = vpop.f32.mrf.mxu0
      %v232 = vadd.f32 0.0, %v231
      %233 = vmatmul.f32.gmra.mxu0 %v178
      %v234 = vpop.f32.mrf.mxu0
      %v235 = vadd.f32 0.0, %v234
      %236 = vdwg.mxu0
      %237 = vmatpush.msra.mxu0 %v196
      %238 = vmatpush.msra.mxu0 %v195
      %239 = vmatpush.msra.mxu0 %v194
      %240 = vmatpush.msra.mxu0 %v193
      %241 = vmatpush.msra.mxu0 %v192
      %242 = vmatpush.msra.mxu0 %v191
      %243 = vmatpush.msra.mxu0 %v190
      %244 = vmatpush.msra.mxu0 %v189
      %245 = vmatpush.msra.mxu0 %v188
      %246 = vmatpush.msra.mxu0 %v187
      %247 = vmatpush.msra.mxu0 %v186
      %248 = vmatpush.msra.mxu0 %v185
      %249 = vmatpush.msra.mxu0 %v184
      %250 = vmatpush.msra.mxu0 %v183
      %251 = vmatpush.msra.mxu0 %v182
      %252 = vmatpush.msra.mxu0 %v181
      %253 = vmatmul.f32.gmra.mxu0 %v179
      %v254 = vpop.f32.mrf.mxu0
      %v255 = vadd.f32 %v232, %v254
      %256 = vmatmul.f32.gmra.mxu0 %v180
      %v257 = vpop.f32.mrf.mxu0
      %v258 = vadd.f32 %v235, %v257
      %259 = vdwg.mxu0
      %v260 = vld [vmem:[#allocation2 + $0x2] sm:$0xff]
      %v261 = vld [vmem:[#allocation2 + $0xa] sm:$0xff]
      %s262 = scalar_lea.vmem %s1, 256
      %v263 = vld [vmem:[%s262] sm:$0xff]
      %v264 = vld [vmem:[%s262 + $0x8] sm:$0xff]
      %v265 = vld [vmem:[%s262 + $0x10] sm:$0xff]
      %v266 = vld [vmem:[%s262 + $0x18] sm:$0xff]
      %v267 = vld [vmem:[%s262 + $0x20] sm:$0xff]
      %v268 = vld [vmem:[%s262 + $0x28] sm:$0xff]
      %v269 = vld [vmem:[%s262 + $0x30] sm:$0xff]
      %v270 = vld [vmem:[%s262 + $0x38] sm:$0xff]
      %v271 = vld [vmem:[%s262 + $0x40] sm:$0xff]
      %v272 = vld [vmem:[%s262 + $0x48] sm:$0xff]
      %v273 = vld [vmem:[%s262 + $0x50] sm:$0xff]
      %v274 = vld [vmem:[%s262 + $0x58] sm:$0xff]
      %v275 = vld [vmem:[%s262 + $0x60] sm:$0xff]
      %v276 = vld [vmem:[%s262 + $0x68] sm:$0xff]
      %v277 = vld [vmem:[%s262 + $0x70] sm:$0xff]
      %v278 = vld [vmem:[%s262 + $0x78] sm:$0xff]
      %279 = vmatpush.msra.mxu0 %v278
      %280 = vmatpush.msra.mxu0 %v277
      %281 = vmatpush.msra.mxu0 %v276
      %282 = vmatpush.msra.mxu0 %v275
      %283 = vmatpush.msra.mxu0 %v274
      %284 = vmatpush.msra.mxu0 %v273
      %285 = vmatpush.msra.mxu0 %v272
      %286 = vmatpush.msra.mxu0 %v271
      %287 = vmatpush.msra.mxu0 %v270
      %288 = vmatpush.msra.mxu0 %v269
      %289 = vmatpush.msra.mxu0 %v268
      %290 = vmatpush.msra.mxu0 %v267
      %291 = vmatpush.msra.mxu0 %v266
      %292 = vmatpush.msra.mxu0 %v265
      %293 = vmatpush.msra.mxu0 %v264
      %294 = vmatpush.msra.mxu0 %v263
      %295 = vmatmul.f32.gmra.mxu0 %v260
      %v296 = vpop.f32.mrf.mxu0
      %v297 = vadd.f32 0.0, %v296
      %298 = vmatmul.f32.gmra.mxu0 %v261
      %v299 = vpop.f32.mrf.mxu0
      %v300 = vadd.f32 0.0, %v299
      %301 = vdwg.mxu0
      %v302 = vadd.f32 %v255, %v297
      %v303 = vadd.f32 %v258, %v300
      %v304 = vld [vmem:[%s2] sm:$0x1]
      %v306 = vperm.slane %v304, 0
      %v308 = vadd.f32 %v302, %v306
      %v309 = vadd.f32 %v303, %v306
      %v310 = vmax.f32 %v308, 0.0
      %v311 = vmax.f32 %v309, 0.0
      %312 = vst [vmem:[#allocation2 + $0x1] sm:$0xff] %v310
      %313 = vst [vmem:[#allocation2 + $0x9] sm:$0xff] %v311
      %v314 = vld [vmem:[#allocation2] sm:$0xff]
      %v315 = vld [vmem:[#allocation2 + $0x8] sm:$0xff]
      %s316 = scalar_lea.vmem %s1, 384
      %v317 = vld [vmem:[%s316] sm:$0xff]
      %v318 = vld [vmem:[%s316 + $0x8] sm:$0xff]
      %v319 = vld [vmem:[%s316 + $0x10] sm:$0xff]
      %v320 = vld [vmem:[%s316 + $0x18] sm:$0xff]
      %v321 = vld [vmem:[%s316 + $0x20] sm:$0xff]
      %v322 = vld [vmem:[%s316 + $0x28] sm:$0xff]
      %v323 = vld [vmem:[%s316 + $0x30] sm:$0xff]
      %v324 = vld [vmem:[%s316 + $0x38] sm:$0xff]
      %v325 = vld [vmem:[%s316 + $0x40] sm:$0xff]
      %v326 = vld [vmem:[%s316 + $0x48] sm:$0xff]
      %v327 = vld [vmem:[%s316 + $0x50] sm:$0xff]
      %v328 = vld [vmem:[%s316 + $0x58] sm:$0xff]
      %v329 = vld [vmem:[%s316 + $0x60] sm:$0xff]
      %v330 = vld [vmem:[%s316 + $0x68] sm:$0xff]
      %v331 = vld [vmem:[%s316 + $0x70] sm:$0xff]
      %v332 = vld [vmem:[%s316 + $0x78] sm:$0xff]
      %v333 = vld [vmem:[#allocation2 + $0x1] sm:$0xff]
      %v334 = vld [vmem:[#allocation2 + $0x9] sm:$0xff]
      %s335 = scalar_lea.vmem %s1, 512
      %v336 = vld [vmem:[%s335] sm:$0xff]
      %v337 = vld [vmem:[%s335 + $0x8] sm:$0xff]
      %v338 = vld [vmem:[%s335 + $0x10] sm:$0xff]
      %v339 = vld [vmem:[%s335 + $0x18] sm:$0xff]
      %v340 = vld [vmem:[%s335 + $0x20] sm:$0xff]
      %v341 = vld [vmem:[%s335 + $0x28] sm:$0xff]
      %v342 = vld [vmem:[%s335 + $0x30] sm:$0xff]
      %v343 = vld [vmem:[%s335 + $0x38] sm:$0xff]
      %v344 = vld [vmem:[%s335 + $0x40] sm:$0xff]
      %v345 = vld [vmem:[%s335 + $0x48] sm:$0xff]
      %v346 = vld [vmem:[%s335 + $0x50] sm:$0xff]
      %v347 = vld [vmem:[%s335 + $0x58] sm:$0xff]
      %v348 = vld [vmem:[%s335 + $0x60] sm:$0xff]
      %v349 = vld [vmem:[%s335 + $0x68] sm:$0xff]
      %v350 = vld [vmem:[%s335 + $0x70] sm:$0xff]
      %v351 = vld [vmem:[%s335 + $0x78] sm:$0xff]
      %352 = vmatpush.msra.mxu0 %v351
      %353 = vmatpush.msra.mxu0 %v350
      %354 = vmatpush.msra.mxu0 %v349
      %355 = vmatpush.msra.mxu0 %v348
      %356 = vmatpush.msra.mxu0 %v347
      %357 = vmatpush.msra.mxu0 %v346
      %358 = vmatpush.msra.mxu0 %v345
      %359 = vmatpush.msra.mxu0 %v344
      %360 = vmatpush.msra.mxu0 %v343
      %361 = vmatpush.msra.mxu0 %v342
      %362 = vmatpush.msra.mxu0 %v341
      %363 = vmatpush.msra.mxu0 %v340
      %364 = vmatpush.msra.mxu0 %v339
      %365 = vmatpush.msra.mxu0 %v338
      %366 = vmatpush.msra.mxu0 %v337
      %367 = vmatpush.msra.mxu0 %v336
      %368 = vmatmul.f32.gmra.mxu0 %v333
      %v369 = vpop.f32.mrf.mxu0
      %v370 = vadd.f32 0.0, %v369
      %371 = vmatmul.f32.gmra.mxu0 %v334
      %v372 = vpop.f32.mrf.mxu0
      %v373 = vadd.f32 0.0, %v372
      %374 = vdwg.mxu0
      %375 = vmatpush.msra.mxu0 %v332
      %376 = vmatpush.msra.mxu0 %v331
      %377 = vmatpush.msra.mxu0 %v330
      %378 = vmatpush.msra.mxu0 %v329
      %379 = vmatpush.msra.mxu0 %v328
      %380 = vmatpush.msra.mxu0 %v327
      %381 = vmatpush.msra.mxu0 %v326
      %382 = vmatpush.msra.mxu0 %v325
      %383 = vmatpush.msra.mxu0 %v324
      %384 = vmatpush.msra.mxu0 %v323
      %385 = vmatpush.msra.mxu0 %v322
      %386 = vmatpush.msra.mxu0 %v321
      %387 = vmatpush.msra.mxu0 %v320
      %388 = vmatpush.msra.mxu0 %v319
      %389 = vmatpush.msra.mxu0 %v318
      %390 = vmatpush.msra.mxu0 %v317
      %391 = vmatmul.f32.gmra.mxu0 %v314
      %v392 = vpop.f32.mrf.mxu0
      %v393 = vadd.f32 %v370, %v392
      %394 = vmatmul.f32.gmra.mxu0 %v315
      %v395 = vpop.f32.mrf.mxu0
      %v396 = vadd.f32 %v373, %v395
      %397 = vdwg.mxu0
      %v398 = vld [vmem:[#allocation2 + $0x2] sm:$0xff]
      %v399 = vld [vmem:[#allocation2 + $0xa] sm:$0xff]
      %s400 = scalar_lea.vmem %s1, 640
      %v401 = vld [vmem:[%s400] sm:$0xff]
      %v402 = vld [vmem:[%s400 + $0x8] sm:$0xff]
      %v403 = vld [vmem:[%s400 + $0x10] sm:$0xff]
      %v404 = vld [vmem:[%s400 + $0x18] sm:$0xff]
      %v405 = vld [vmem:[%s400 + $0x20] sm:$0xff]
      %v406 = vld [vmem:[%s400 + $0x28] sm:$0xff]
      %v407 = vld [vmem:[%s400 + $0x30] sm:$0xff]
      %v408 = vld [vmem:[%s400 + $0x38] sm:$0xff]
      %v409 = vld [vmem:[%s400 + $0x40] sm:$0xff]
      %v410 = vld [vmem:[%s400 + $0x48] sm:$0xff]
      %v411 = vld [vmem:[%s400 + $0x50] sm:$0xff]
      %v412 = vld [vmem:[%s400 + $0x58] sm:$0xff]
      %v413 = vld [vmem:[%s400 + $0x60] sm:$0xff]
      %v414 = vld [vmem:[%s400 + $0x68] sm:$0xff]
      %v415 = vld [vmem:[%s400 + $0x70] sm:$0xff]
      %v416 = vld [vmem:[%s400 + $0x78] sm:$0xff]
      %417 = vmatpush.msra.mxu0 %v416
      %418 = vmatpush.msra.mxu0 %v415
      %419 = vmatpush.msra.mxu0 %v414
      %420 = vmatpush.msra.mxu0 %v413
      %421 = vmatpush.msra.mxu0 %v412
      %422 = vmatpush.msra.mxu0 %v411
      %423 = vmatpush.msra.mxu0 %v410
      %424 = vmatpush.msra.mxu0 %v409
      %425 = vmatpush.msra.mxu0 %v408
      %426 = vmatpush.msra.mxu0 %v407
      %427 = vmatpush.msra.mxu0 %v406
      %428 = vmatpush.msra.mxu0 %v405
      %429 = vmatpush.msra.mxu0 %v404
      %430 = vmatpush.msra.mxu0 %v403
      %431 = vmatpush.msra.mxu0 %v402
      %432 = vmatpush.msra.mxu0 %v401
      %433 = vmatmul.f32.gmra.mxu0 %v398
      %v434 = vpop.f32.mrf.mxu0
      %v435 = vadd.f32 0.0, %v434
      %436 = vmatmul.f32.gmra.mxu0 %v399
      %v437 = vpop.f32.mrf.mxu0
      %v438 = vadd.f32 0.0, %v437
      %439 = vdwg.mxu0
      %v440 = vadd.f32 %v393, %v435
      %v441 = vadd.f32 %v396, %v438
      %s442 = scalar_lea.vmem %s2, 1
      %v443 = vld [vmem:[%s442] sm:$0x1]
      %v445 = vperm.slane %v443, 0
      %v447 = vadd.f32 %v440, %v445
      %v448 = vadd.f32 %v441, %v445
      %v449 = vadd.f32 %v447, %v177
      %v450 = vadd.f32 %v448, %v178
      %451 = vst [vmem:[#allocation2 + $0x1] sm:$0xff] %v449
      %452 = vst [vmem:[#allocation2 + $0x9] sm:$0xff] %v450
      %v453 = vld [vmem:[#allocation2 + $0x1] sm:$0xff]
      %v454 = vld [vmem:[#allocation2 + $0x9] sm:$0xff]
      %v455 = vld [vmem:[#allocation2] sm:$0xff]
      %v456 = vld [vmem:[#allocation2 + $0x8] sm:$0xff]
      %s457 = scalar_lea.vmem %s1, 768
      %v458 = vld [vmem:[%s457] sm:$0xff]
      %v459 = vld [vmem:[%s457 + $0x8] sm:$0xff]
      %v460 = vld [vmem:[%s457 + $0x10] sm:$0xff]
      %v461 = vld [vmem:[%s457 + $0x18] sm:$0xff]
      %v462 = vld [vmem:[%s457 + $0x20] sm:$0xff]
      %v463 = vld [vmem:[%s457 + $0x28] sm:$0xff]
      %v464 = vld [vmem:[%s457 + $0x30] sm:$0xff]
      %v465 = vld [vmem:[%s457 + $0x38] sm:$0xff]
      %v466 = vld [vmem:[%s457 + $0x40] sm:$0xff]
      %v467 = vld [vmem:[%s457 + $0x48] sm:$0xff]
      %v468 = vld [vmem:[%s457 + $0x50] sm:$0xff]
      %v469 = vld [vmem:[%s457 + $0x58] sm:$0xff]
      %v470 = vld [vmem:[%s457 + $0x60] sm:$0xff]
      %v471 = vld [vmem:[%s457 + $0x68] sm:$0xff]
      %v472 = vld [vmem:[%s457 + $0x70] sm:$0xff]
      %v473 = vld [vmem:[%s457 + $0x78] sm:$0xff]
      %s474 = scalar_lea.vmem %s1, 896
      %v475 = vld [vmem:[%s474] sm:$0xff]
      %v476 = vld [vmem:[%s474 + $0x8] sm:$0xff]
      %v477 = vld [vmem:[%s474 + $0x10] sm:$0xff]
      %v478 = vld [vmem:[%s474 + $0x18] sm:$0xff]
      %v479 = vld [vmem:[%s474 + $0x20] sm:$0xff]
      %v480 = vld [vmem:[%s474 + $0x28] sm:$0xff]
      %v481 = vld [vmem:[%s474 + $0x30] sm:$0xff]
      %v482 = vld [vmem:[%s474 + $0x38] sm:$0xff]
      %v483 = vld [vmem:[%s474 + $0x40] sm:$0xff]
      %v484 = vld [vmem:[%s474 + $0x48] sm:$0xff]
      %v485 = vld [vmem:[%s474 + $0x50] sm:$0xff]
      %v486 = vld [vmem:[%s474 + $0x58] sm:$0xff]
      %v487 = vld [vmem:[%s474 + $0x60] sm:$0xff]
      %v488 = vld [vmem:[%s474 + $0x68] sm:$0xff]
      %v489 = vld [vmem:[%s474 + $0x70] sm:$0xff]
      %v490 = vld [vmem:[%s474 + $0x78] sm:$0xff]
      %491 = vmatpush.msra.mxu0 %v490
      %492 = vmatpush.msra.mxu0 %v489
      %493 = vmatpush.msra.mxu0 %v488
      %494 = vmatpush.msra.mxu0 %v487
      %495 = vmatpush.msra.mxu0 %v486
      %496 = vmatpush.msra.mxu0 %v485
      %497 = vmatpush.msra.mxu0 %v484
      %498 = vmatpush.msra.mxu0 %v483
      %499 = vmatpush.msra.mxu0 %v482
      %500 = vmatpush.msra.mxu0 %v481
      %501 = vmatpush.msra.mxu0 %v480
      %502 = vmatpush.msra.mxu0 %v479
      %503 = vmatpush.msra.mxu0 %v478
      %504 = vmatpush.msra.mxu0 %v477
      %505 = vmatpush.msra.mxu0 %v476
      %506 = vmatpush.msra.mxu0 %v475
      %507 = vmatmul.f32.gmra.mxu0 %v453
      %v508 = vpop.f32.mrf.mxu0
      %v509 = vadd.f32 0.0, %v508
      %510 = vmatmul.f32.gmra.mxu0 %v454
      %v511 = vpop.f32.mrf.mxu0
      %v512 = vadd.f32 0.0, %v511
      %513 = vdwg.mxu0
      %514 = vmatpush.msra.mxu0 %v473
      %515 = vmatpush.msra.mxu0 %v472
      %516 = vmatpush.msra.mxu0 %v471
      %517 = vmatpush.msra.mxu0 %v470
      %518 = vmatpush.msra.mxu0 %v469
      %519 = vmatpush.msra.mxu0 %v468
      %520 = vmatpush.msra.mxu0 %v467
      %521 = vmatpush.msra.mxu0 %v466
      %522 = vmatpush.msra.mxu0 %v465
      %523 = vmatpush.msra.mxu0 %v464
      %524 = vmatpush.msra.mxu0 %v463
      %525 = vmatpush.msra.mxu0 %v462
      %526 = vmatpush.msra.mxu0 %v461
      %527 = vmatpush.msra.mxu0 %v460
      %528 = vmatpush.msra.mxu0 %v459
      %529 = vmatpush.msra.mxu0 %v458
      %530 = vmatmul.f32.gmra.mxu0 %v455
      %v531 = vpop.f32.mrf.mxu0
      %v532 = vadd.f32 %v509, %v531
      %533 = vmatmul.f32.gmra.mxu0 %v456
      %v534 = vpop.f32.mrf.mxu0
      %v535 = vadd.f32 %v512, %v534
      %536 = vdwg.mxu0
      %v537 = vld [vmem:[#allocation2 + $0x2] sm:$0xff]
      %v538 = vld [vmem:[#allocation2 + $0xa] sm:$0xff]
      %s539 = scalar_lea.vmem %s1, 1024
      %v540 = vld [vmem:[%s539] sm:$0xff]
      %v541 = vld [vmem:[%s539 + $0x8] sm:$0xff]
      %v542 = vld [vmem:[%s539 + $0x10] sm:$0xff]
      %v543 = vld [vmem:[%s539 + $0x18] sm:$0xff]
      %v544 = vld [vmem:[%s539 + $0x20] sm:$0xff]
      %v545 = vld [vmem:[%s539 + $0x28] sm:$0xff]
      %v546 = vld [vmem:[%s539 + $0x30] sm:$0xff]
      %v547 = vld [vmem:[%s539 + $0x38] sm:$0xff]
      %v548 = vld [vmem:[%s539 + $0x40] sm:$0xff]
      %v549 = vld [vmem:[%s539 + $0x48] sm:$0xff]
      %v550 = vld [vmem:[%s539 + $0x50] sm:$0xff]
      %v551 = vld [vmem:[%s539 + $0x58] sm:$0xff]
      %v552 = vld [vmem:[%s539 + $0x60] sm:$0xff]
      %v553 = vld [vmem:[%s539 + $0x68] sm:$0xff]
      %v554 = vld [vmem:[%s539 + $0x70] sm:$0xff]
      %v555 = vld [vmem:[%s539 + $0x78] sm:$0xff]
      %556 = vmatpush.msra.mxu0 %v555
      %557 = vmatpush.msra.mxu0 %v554
      %558 = vmatpush.msra.mxu0 %v553
      %559 = vmatpush.msra.mxu0 %v552
      %560 = vmatpush.msra.mxu0 %v551
      %561 = vmatpush.msra.mxu0 %v550
      %562 = vmatpush.msra.mxu0 %v549
      %563 = vmatpush.msra.mxu0 %v548
      %564 = vmatpush.msra.mxu0 %v547
      %565 = vmatpush.msra.mxu0 %v546
      %566 = vmatpush.msra.mxu0 %v545
      %567 = vmatpush.msra.mxu0 %v544
      %568 = vmatpush.msra.mxu0 %v543
      %569 = vmatpush.msra.mxu0 %v542
      %570 = vmatpush.msra.mxu0 %v541
      %571 = vmatpush.msra.mxu0 %v540
      %572 = vmatmul.f32.gmra.mxu0 %v537
      %v573 = vpop.f32.mrf.mxu0
      %v574 = vadd.f32 0.0, %v573
      %575 = vmatmul.f32.gmra.mxu0 %v538
      %v576 = vpop.f32.mrf.mxu0
      %v577 = vadd.f32 0.0, %v576
      %578 = vdwg.mxu0
      %v579 = vadd.f32 %v532, %v574
      %v580 = vadd.f32 %v535, %v577
      %s581 = scalar_lea.vmem %s2, 2
      %v582 = vld [vmem:[%s581] sm:$0x1]
      %v584 = vperm.slane %v582, 0
      %v586 = vadd.f32 %v579, %v584
      %v587 = vadd.f32 %v580, %v584
      %v588 = vmax.f32 %v586, 0.0
      %v589 = vmax.f32 %v587, 0.0
      %590 = vst [vmem:[#allocation2 + $0x1] sm:$0xff] %v588
      %591 = vst [vmem:[#allocation2 + $0x9] sm:$0xff] %v589
      %v592 = vld [vmem:[#allocation2] sm:$0xff]
      %v593 = vld [vmem:[#allocation2 + $0x8] sm:$0xff]
      %s594 = scalar_lea.vmem %s1, 1152
      %v595 = vld [vmem:[%s594] sm:$0xff]
      %v596 = vld [vmem:[%s594 + $0x8] sm:$0xff]
      %v597 = vld [vmem:[%s594 + $0x10] sm:$0xff]
      %v598 = vld [vmem:[%s594 + $0x18] sm:$0xff]
      %v599 = vld [vmem:[%s594 + $0x20] sm:$0xff]
      %v600 = vld [vmem:[%s594 + $0x28] sm:$0xff]
      %v601 = vld [vmem:[%s594 + $0x30] sm:$0xff]
      %v602 = vld [vmem:[%s594 + $0x38] sm:$0xff]
      %v603 = vld [vmem:[%s594 + $0x40] sm:$0xff]
      %v604 = vld [vmem:[%s594 + $0x48] sm:$0xff]
      %v605 = vld [vmem:[%s594 + $0x50] sm:$0xff]
      %v606 = vld [vmem:[%s594 + $0x58] sm:$0xff]
      %v607 = vld [vmem:[%s594 + $0x60] sm:$0xff]
      %v608 = vld [vmem:[%s594 + $0x68] sm:$0xff]
      %v609 = vld [vmem:[%s594 + $0x70] sm:$0xff]
      %v610 = vld [vmem:[%s594 + $0x78] sm:$0xff]
      %v611 = vld [vmem:[#allocation2 + $0x1] sm:$0xff]
      %v612 = vld [vmem:[#allocation2 + $0x9] sm:$0xff]
      %s613 = scalar_lea.vmem %s1, 1280
      %v614 = vld [vmem:[%s613] sm:$0xff]
      %v615 = vld [vmem:[%s613 + $0x8] sm:$0xff]
      %v616 = vld [vmem:[%s613 + $0x10] sm:$0xff]
      %v617 = vld [vmem:[%s613 + $0x18] sm:$0xff]
      %v618 = vld [vmem:[%s613 + $0x20] sm:$0xff]
      %v619 = vld [vmem:[%s613 + $0x28] sm:$0xff]
      %v620 = vld [vmem:[%s613 + $0x30] sm:$0xff]
      %v621 = vld [vmem:[%s613 + $0x38] sm:$0xff]
      %v622 = vld [vmem:[%s613 + $0x40] sm:$0xff]
      %v623 = vld [vmem:[%s613 + $0x48] sm:$0xff]
      %v624 = vld [vmem:[%s613 + $0x50] sm:$0xff]
      %v625 = vld [vmem:[%s613 + $0x58] sm:$0xff]
      %v626 = vld [vmem:[%s613 + $0x60] sm:$0xff]
      %v627 = vld [vmem:[%s613 + $0x68] sm:$0xff]
      %v628 = vld [vmem:[%s613 + $0x70] sm:$0xff]
      %v629 = vld [vmem:[%s613 + $0x78] sm:$0xff]
      %630 = vmatpush.msra.mxu0 %v629
      %631 = vmatpush.msra.mxu0 %v628
      %632 = vmatpush.msra.mxu0 %v627
      %633 = vmatpush.msra.mxu0 %v626
      %634 = vmatpush.msra.mxu0 %v625
      %635 = vmatpush.msra.mxu0 %v624
      %636 = vmatpush.msra.mxu0 %v623
      %637 = vmatpush.msra.mxu0 %v622
      %638 = vmatpush.msra.mxu0 %v621
      %639 = vmatpush.msra.mxu0 %v620
      %640 = vmatpush.msra.mxu0 %v619
      %641 = vmatpush.msra.mxu0 %v618
      %642 = vmatpush.msra.mxu0 %v617
      %643 = vmatpush.msra.mxu0 %v616
      %644 = vmatpush.msra.mxu0 %v615
      %645 = vmatpush.msra.mxu0 %v614
      %646 = vmatmul.f32.gmra.mxu0 %v611
      %v647 = vpop.f32.mrf.mxu0
      %v648 = vadd.f32 0.0, %v647
      %649 = vmatmul.f32.gmra.mxu0 %v612
      %v650 = vpop.f32.mrf.mxu0
      %v651 = vadd.f32 0.0, %v650
      %652 = vdwg.mxu0
      %653 = vmatpush.msra.mxu0 %v610
      %654 = vmatpush.msra.mxu0 %v609
      %655 = vmatpush.msra.mxu0 %v608
      %656 = vmatpush.msra.mxu0 %v607
      %657 = vmatpush.msra.mxu0 %v606
      %658 = vmatpush.msra.mxu0 %v605
      %659 = vmatpush.msra.mxu0 %v604
      %660 = vmatpush.msra.mxu0 %v603
      %661 = vmatpush.msra.mxu0 %v602
      %662 = vmatpush.msra.mxu0 %v601
      %663 = vmatpush.msra.mxu0 %v600
      %664 = vmatpush.msra.mxu0 %v599
      %665 = vmatpush.msra.mxu0 %v598
      %666 = vmatpush.msra.mxu0 %v597
      %667 = vmatpush.msra.mxu0 %v596
      %668 = vmatpush.msra.mxu0 %v595
      %669 = vmatmul.f32.gmra.mxu0 %v592
      %v670 = vpop.f32.mrf.mxu0
      %v671 = vadd.f32 %v648, %v670
      %672 = vmatmul.f32.gmra.mxu0 %v593
      %v673 = vpop.f32.mrf.mxu0
      %v674 = vadd.f32 %v651, %v673
      %675 = vdwg.mxu0
      %v676 = vld [vmem:[#allocation2 + $0x2] sm:$0xff]
      %v677 = vld [vmem:[#allocation2 + $0xa] sm:$0xff]
      %s678 = scalar_lea.vmem %s1, 1408
      %v679 = vld [vmem:[%s678] sm:$0xff]
      %v680 = vld [vmem:[%s678 + $0x8] sm:$0xff]
      %v681 = vld [vmem:[%s678 + $0x10] sm:$0xff]
      %v682 = vld [vmem:[%s678 + $0x18] sm:$0xff]
      %v683 = vld [vmem:[%s678 + $0x20] sm:$0xff]
      %v684 = vld [vmem:[%s678 + $0x28] sm:$0xff]
      %v685 = vld [vmem:[%s678 + $0x30] sm:$0xff]
      %v686 = vld [vmem:[%s678 + $0x38] sm:$0xff]
      %v687 = vld [vmem:[%s678 + $0x40] sm:$0xff]
      %v688 = vld [vmem:[%s678 + $0x48] sm:$0xff]
      %v689 = vld [vmem:[%s678 + $0x50] sm:$0xff]
      %v690 = vld [vmem:[%s678 + $0x58] sm:$0xff]
      %v691 = vld [vmem:[%s678 + $0x60] sm:$0xff]
      %v692 = vld [vmem:[%s678 + $0x68] sm:$0xff]
      %v693 = vld [vmem:[%s678 + $0x70] sm:$0xff]
      %v694 = vld [vmem:[%s678 + $0x78] sm:$0xff]
      %695 = vmatpush.msra.mxu0 %v694
      %696 = vmatpush.msra.mxu0 %v693
      %697 = vmatpush.msra.mxu0 %v692
      %698 = vmatpush.msra.mxu0 %v691
      %699 = vmatpush.msra.mxu0 %v690
      %700 = vmatpush.msra.mxu0 %v689
      %701 = vmatpush.msra.mxu0 %v688
      %702 = vmatpush.msra.mxu0 %v687
      %703 = vmatpush.msra.mxu0 %v686
      %704 = vmatpush.msra.mxu0 %v685
      %705 = vmatpush.msra.mxu0 %v684
      %706 = vmatpush.msra.mxu0 %v683
      %707 = vmatpush.msra.mxu0 %v682
      %708 = vmatpush.msra.mxu0 %v681
      %709 = vmatpush.msra.mxu0 %v680
      %710 = vmatpush.msra.mxu0 %v679
      %711 = vmatmul.f32.gmra.mxu0 %v676
      %v712 = vpop.f32.mrf.mxu0
      %v713 = vadd.f32 0.0, %v712
      %714 = vmatmul.f32.gmra.mxu0 %v677
      %v715 = vpop.f32.mrf.mxu0
      %v716 = vadd.f32 0.0, %v715
      %717 = vdwg.mxu0
      %v718 = vadd.f32 %v671, %v713
      %v719 = vadd.f32 %v674, %v716
      %s720 = scalar_lea.vmem %s2, 3
      %v721 = vld [vmem:[%s720] sm:$0x1]
      %v723 = vperm.slane %v721, 0
      %v725 = vadd.f32 %v718, %v723
      %v726 = vadd.f32 %v719, %v723
      %v727 = vadd.f32 %v725, %v453
      %v728 = vadd.f32 %v726, %v454
      %729 = vst [vmem:[#allocation2 + $0x1] sm:$0xff] %v727
      %730 = vst [vmem:[#allocation2 + $0x9] sm:$0xff] %v728
      %v731 = vld [vmem:[#allocation2 + $0x1] sm:$0xff]
      %v732 = vld [vmem:[#allocation2 + $0x9] sm:$0xff]
      %v733 = vld [vmem:[#allocation2] sm:$0xff]
      %v734 = vld [vmem:[#allocation2 + $0x8] sm:$0xff]
      %s735 = scalar_lea.vmem %s1, 1536
      %v736 = vld [vmem:[%s735] sm:$0xff]
      %v737 = vld [vmem:[%s735 + $0x8] sm:$0xff]
      %v738 = vld [vmem:[%s735 + $0x10] sm:$0xff]
      %v739 = vld [vmem:[%s735 + $0x18] sm:$0xff]
      %v740 = vld [vmem:[%s735 + $0x20] sm:$0xff]
      %v741 = vld [vmem:[%s735 + $0x28] sm:$0xff]
      %v742 = vld [vmem:[%s735 + $0x30] sm:$0xff]
      %v743 = vld [vmem:[%s735 + $0x38] sm:$0xff]
      %v744 = vld [vmem:[%s735 + $0x40] sm:$0xff]
      %v745 = vld [vmem:[%s735 + $0x48] sm:$0xff]
      %v746 = vld [vmem:[%s735 + $0x50] sm:$0xff]
      %v747 = vld [vmem:[%s735 + $0x58] sm:$0xff]
      %v748 = vld [vmem:[%s735 + $0x60] sm:$0xff]
      %v749 = vld [vmem:[%s735 + $0x68] sm:$0xff]
      %v750 = vld [vmem:[%s735 + $0x70] sm:$0xff]
      %v751 = vld [vmem:[%s735 + $0x78] sm:$0xff]
      %s752 = scalar_lea.vmem %s1, 1664
      %v753 = vld [vmem:[%s752] sm:$0xff]
      %v754 = vld [vmem:[%s752 + $0x8] sm:$0xff]
      %v755 = vld [vmem:[%s752 + $0x10] sm:$0xff]
      %v756 = vld [vmem:[%s752 + $0x18] sm:$0xff]
      %v757 = vld [vmem:[%s752 + $0x20] sm:$0xff]
      %v758 = vld [vmem:[%s752 + $0x28] sm:$0xff]
      %v759 = vld [vmem:[%s752 + $0x30] sm:$0xff]
      %v760 = vld [vmem:[%s752 + $0x38] sm:$0xff]
      %v761 = vld [vmem:[%s752 + $0x40] sm:$0xff]
      %v762 = vld [vmem:[%s752 + $0x48] sm:$0xff]
      %v763 = vld [vmem:[%s752 + $0x50] sm:$0xff]
      %v764 = vld [vmem:[%s752 + $0x58] sm:$0xff]
      %v765 = vld [vmem:[%s752 + $0x60] sm:$0xff]
      %v766 = vld [vmem:[%s752 + $0x68] sm:$0xff]
      %v767 = vld [vmem:[%s752 + $0x70] sm:$0xff]
      %v768 = vld [vmem:[%s752 + $0x78] sm:$0xff]
      %769 = vmatpush.msra.mxu0 %v768
      %770 = vmatpush.msra.mxu0 %v767
      %771 = vmatpush.msra.mxu0 %v766
      %772 = vmatpush.msra.mxu0 %v765
      %773 = vmatpush.msra.mxu0 %v764
      %774 = vmatpush.msra.mxu0 %v763
      %775 = vmatpush.msra.mxu0 %v762
      %776 = vmatpush.msra.mxu0 %v761
      %777 = vmatpush.msra.mxu0 %v760
      %778 = vmatpush.msra.mxu0 %v759
      %779 = vmatpush.msra.mxu0 %v758
      %780 = vmatpush.msra.mxu0 %v757
      %781 = vmatpush.msra.mxu0 %v756
      %782 = vmatpush.msra.mxu0 %v755
      %783 = vmatpush.msra.mxu0 %v754
      %784 = vmatpush.msra.mxu0 %v753
      %785 = vmatmul.f32.gmra.mxu0 %v731
      %v786 = vpop.f32.mrf.mxu0
      %v787 = vadd.f32 0.0, %v786
      %788 = vmatmul.f32.gmra.mxu0 %v732
      %v789 = vpop.f32.mrf.mxu0
      %v790 = vadd.f32 0.0, %v789
      %791 = vdwg.mxu0
      %792 = vmatpush.msra.mxu0 %v751
      %793 = vmatpush.msra.mxu0 %v750
      %794 = vmatpush.msra.mxu0 %v749
      %795 = vmatpush.msra.mxu0 %v748
      %796 = vmatpush.msra.mxu0 %v747
      %797 = vmatpush.msra.mxu0 %v746
      %798 = vmatpush.msra.mxu0 %v745
      %799 = vmatpush.msra.mxu0 %v744
      %800 = vmatpush.msra.mxu0 %v743
      %801 = vmatpush.msra.mxu0 %v742
      %802 = vmatpush.msra.mxu0 %v741
      %803 = vmatpush.msra.mxu0 %v740
      %804 = vmatpush.msra.mxu0 %v739
      %805 = vmatpush.msra.mxu0 %v738
      %806 = vmatpush.msra.mxu0 %v737
      %807 = vmatpush.msra.mxu0 %v736
      %808 = vmatmul.f32.gmra.mxu0 %v733
      %v809 = vpop.f32.mrf.mxu0
      %v810 = vadd.f32 %v787, %v809
      %811 = vmatmul.f32.gmra.mxu0 %v734
      %v812 = vpop.f32.mrf.mxu0
      %v813 = vadd.f32 %v790, %v812
      %814 = vdwg.mxu0
      %v815 = vld [vmem:[#allocation2 + $0x2] sm:$0xff]
      %v816 = vld [vmem:[#allocation2 + $0xa] sm:$0xff]
      %s817 = scalar_lea.vmem %s1, 1792
      %v818 = vld [vmem:[%s817] sm:$0xff]
      %v819 = vld [vmem:[%s817 + $0x8] sm:$0xff]
      %v820 = vld [vmem:[%s817 + $0x10] sm:$0xff]
      %v821 = vld [vmem:[%s817 + $0x18] sm:$0xff]
      %v822 = vld [vmem:[%s817 + $0x20] sm:$0xff]
      %v823 = vld [vmem:[%s817 + $0x28] sm:$0xff]
      %v824 = vld [vmem:[%s817 + $0x30] sm:$0xff]
      %v825 = vld [vmem:[%s817 + $0x38] sm:$0xff]
      %v826 = vld [vmem:[%s817 + $0x40] sm:$0xff]
      %v827 = vld [vmem:[%s817 + $0x48] sm:$0xff]
      %v828 = vld [vmem:[%s817 + $0x50] sm:$0xff]
      %v829 = vld [vmem:[%s817 + $0x58] sm:$0xff]
      %v830 = vld [vmem:[%s817 + $0x60] sm:$0xff]
      %v831 = vld [vmem:[%s817 + $0x68] sm:$0xff]
      %v832 = vld [vmem:[%s817 + $0x70] sm:$0xff]
      %v833 = vld [vmem:[%s817 + $0x78] sm:$0xff]
      %834 = vmatpush.msra.mxu0 %v833
      %835 = vmatpush.msra.mxu0 %v832
      %836 = vmatpush.msra.mxu0 %v831
      %837 = vmatpush.msra.mxu0 %v830
      %838 = vmatpush.msra.mxu0 %v829
      %839 = vmatpush.msra.mxu0 %v828
      %840 = vmatpush.msra.mxu0 %v827
      %841 = vmatpush.msra.mxu0 %v826
      %842 = vmatpush.msra.mxu0 %v825
      %843 = vmatpush.msra.mxu0 %v824
      %844 = vmatpush.msra.mxu0 %v823
      %845 = vmatpush.msra.mxu0 %v822
      %846 = vmatpush.msra.mxu0 %v821
      %847 = vmatpush.msra.mxu0 %v820
      %848 = vmatpush.msra.mxu0 %v819
      %849 = vmatpush.msra.mxu0 %v818
      %850 = vmatmul.f32.gmra.mxu0 %v815
      %v851 = vpop.f32.mrf.mxu0
      %v852 = vadd.f32 0.0, %v851
      %853 = vmatmul.f32.gmra.mxu0 %v816
      %v854 = vpop.f32.mrf.mxu0
      %v855 = vadd.f32 0.0, %v854
      %856 = vdwg.mxu0
      %v857 = vadd.f32 %v810, %v852
      %v858 = vadd.f32 %v813, %v855
      %s859 = scalar_lea.vmem %s2, 4
      %v860 = vld [vmem:[%s859] sm:$0x1]
      %v862 = vperm.slane %v860, 0
      %v864 = vadd.f32 %v857, %v862
      %v865 = vadd.f32 %v858, %v862
      %v866 = vmax.f32 %v864, 0.0
      %v867 = vmax.f32 %v865, 0.0
      %868 = vst [vmem:[#allocation2 + $0x1] sm:$0xff] %v866
      %869 = vst [vmem:[#allocation2 + $0x9] sm:$0xff] %v867
      %v870 = vld [vmem:[#allocation2] sm:$0xff]
      %v871 = vld [vmem:[#allocation2 + $0x8] sm:$0xff]
      %s872 = scalar_lea.vmem %s1, 1920
      %v873 = vld [vmem:[%s872] sm:$0xff]
      %v874 = vld [vmem:[%s872 + $0x8] sm:$0xff]
      %v875 = vld [vmem:[%s872 + $0x10] sm:$0xff]
      %v876 = vld [vmem:[%s872 + $0x18] sm:$0xff]
      %v877 = vld [vmem:[%s872 + $0x20] sm:$0xff]
      %v878 = vld [vmem:[%s872 + $0x28] sm:$0xff]
      %v879 = vld [vmem:[%s872 + $0x30] sm:$0xff]
      %v880 = vld [vmem:[%s872 + $0x38] sm:$0xff]
      %v881 = vld [vmem:[%s872 + $0x40] sm:$0xff]
      %v882 = vld [vmem:[%s872 + $0x48] sm:$0xff]
      %v883 = vld [vmem:[%s872 + $0x50] sm:$0xff]
      %v884 = vld [vmem:[%s872 + $0x58] sm:$0xff]
      %v885 = vld [vmem:[%s872 + $0x60] sm:$0xff]
      %v886 = vld [vmem:[%s872 + $0x68] sm:$0xff]
      %v887 = vld [vmem:[%s872 + $0x70] sm:$0xff]
      %v888 = vld [vmem:[%s872 + $0x78] sm:$0xff]
      %v889 = vld [vmem:[#allocation2 + $0x1] sm:$0xff]
      %v890 = vld [vmem:[#allocation2 + $0x9] sm:$0xff]
      %s891 = scalar_lea.vmem %s1, 2048
      %v892 = vld [vmem:[%s891] sm:$0xff]
      %v893 = vld [vmem:[%s891 + $0x8] sm:$0xff]
      %v894 = vld [vmem:[%s891 + $0x10] sm:$0xff]
      %v895 = vld [vmem:[%s891 + $0x18] sm:$0xff]
      %v896 = vld [vmem:[%s891 + $0x20] sm:$0xff]
      %v897 = vld [vmem:[%s891 + $0x28] sm:$0xff]
      %v898 = vld [vmem:[%s891 + $0x30] sm:$0xff]
      %v899 = vld [vmem:[%s891 + $0x38] sm:$0xff]
      %v900 = vld [vmem:[%s891 + $0x40] sm:$0xff]
      %v901 = vld [vmem:[%s891 + $0x48] sm:$0xff]
      %v902 = vld [vmem:[%s891 + $0x50] sm:$0xff]
      %v903 = vld [vmem:[%s891 + $0x58] sm:$0xff]
      %v904 = vld [vmem:[%s891 + $0x60] sm:$0xff]
      %v905 = vld [vmem:[%s891 + $0x68] sm:$0xff]
      %v906 = vld [vmem:[%s891 + $0x70] sm:$0xff]
      %v907 = vld [vmem:[%s891 + $0x78] sm:$0xff]
      %908 = vmatpush.msra.mxu0 %v907
      %909 = vmatpush.msra.mxu0 %v906
      %910 = vmatpush.msra.mxu0 %v905
      %911 = vmatpush.msra.mxu0 %v904
      %912 = vmatpush.msra.mxu0 %v903
      %913 = vmatpush.msra.mxu0 %v902
      %914 = vmatpush.msra.mxu0 %v901
      %915 = vmatpush.msra.mxu0 %v900
      %916 = vmatpush.msra.mxu0 %v899
      %917 = vmatpush.msra.mxu0 %v898
      %918 = vmatpush.msra.mxu0 %v897
      %919 = vmatpush.msra.mxu0 %v896
      %920 = vmatpush.msra.mxu0 %v895
      %921 = vmatpush.msra.mxu0 %v894
      %922 = vmatpush.msra.mxu0 %v893
      %923 = vmatpush.msra.mxu0 %v892
      %924 = vmatmul.f32.gmra.mxu0 %v889
      %v925 = vpop.f32.mrf.mxu0
      %v926 = vadd.f32 0.0, %v925
      %927 = vmatmul.f32.gmra.mxu0 %v890
      %v928 = vpop.f32.mrf.mxu0
      %v929 = vadd.f32 0.0, %v928
      %930 = vdwg.mxu0
      %931 = vmatpush.msra.mxu0 %v888
      %932 = vmatpush.msra.mxu0 %v887
      %933 = vmatpush.msra.mxu0 %v886
      %934 = vmatpush.msra.mxu0 %v885
      %935 = vmatpush.msra.mxu0 %v884
      %936 = vmatpush.msra.mxu0 %v883
      %937 = vmatpush.msra.mxu0 %v882
      %938 = vmatpush.msra.mxu0 %v881
      %939 = vmatpush.msra.mxu0 %v880
      %940 = vmatpush.msra.mxu0 %v879
      %941 = vmatpush.msra.mxu0 %v878
      %942 = vmatpush.msra.mxu0 %v877
      %943 = vmatpush.msra.mxu0 %v876
      %944 = vmatpush.msra.mxu0 %v875
      %945 = vmatpush.msra.mxu0 %v874
      %946 = vmatpush.msra.mxu0 %v873
      %947 = vmatmul.f32.gmra.mxu0 %v870
      %v948 = vpop.f32.mrf.mxu0
      %v949 = vadd.f32 %v926, %v948
      %950 = vmatmul.f32.gmra.mxu0 %v871
      %v951 = vpop.f32.mrf.mxu0
      %v952 = vadd.f32 %v929, %v951
      %953 = vdwg.mxu0
      %v954 = vld [vmem:[#allocation2 + $0x2] sm:$0xff]
      %v955 = vld [vmem:[#allocation2 + $0xa] sm:$0xff]
      %s956 = scalar_lea.vmem %s1, 2176
      %v957 = vld [vmem:[%s956] sm:$0xff]
      %v958 = vld [vmem:[%s956 + $0x8] sm:$0xff]
      %v959 = vld [vmem:[%s956 + $0x10] sm:$0xff]
      %v960 = vld [vmem:[%s956 + $0x18] sm:$0xff]
      %v961 = vld [vmem:[%s956 + $0x20] sm:$0xff]
      %v962 = vld [vmem:[%s956 + $0x28] sm:$0xff]
      %v963 = vld [vmem:[%s956 + $0x30] sm:$0xff]
      %v964 = vld [vmem:[%s956 + $0x38] sm:$0xff]
      %v965 = vld [vmem:[%s956 + $0x40] sm:$0xff]
      %v966 = vld [vmem:[%s956 + $0x48] sm:$0xff]
      %v967 = vld [vmem:[%s956 + $0x50] sm:$0xff]
      %v968 = vld [vmem:[%s956 + $0x58] sm:$0xff]
      %v969 = vld [vmem:[%s956 + $0x60] sm:$0xff]
      %v970 = vld [vmem:[%s956 + $0x68] sm:$0xff]
      %v971 = vld [vmem:[%s956 + $0x70] sm:$0xff]
      %v972 = vld [vmem:[%s956 + $0x78] sm:$0xff]
      %973 = vmatpush.msra.mxu0 %v972
      %974 = vmatpush.msra.mxu0 %v971
      %975 = vmatpush.msra.mxu0 %v970
      %976 = vmatpush.msra.mxu0 %v969
      %977 = vmatpush.msra.mxu0 %v968
      %978 = vmatpush.msra.mxu0 %v967
      %979 = vmatpush.msra.mxu0 %v966
      %980 = vmatpush.msra.mxu0 %v965
      %981 = vmatpush.msra.mxu0 %v964
      %982 = vmatpush.msra.mxu0 %v963
      %983 = vmatpush.msra.mxu0 %v962
      %984 = vmatpush.msra.mxu0 %v961
      %985 = vmatpush.msra.mxu0 %v960
      %986 = vmatpush.msra.mxu0 %v959
      %987 = vmatpush.msra.mxu0 %v958
      %988 = vmatpush.msra.mxu0 %v957
      %989 = vmatmul.f32.gmra.mxu0 %v954
      %v990 = vpop.f32.mrf.mxu0
      %v991 = vadd.f32 0.0, %v990
      %992 = vmatmul.f32.gmra.mxu0 %v955
      %v993 = vpop.f32.mrf.mxu0
      %v994 = vadd.f32 0.0, %v993
      %995 = vdwg.mxu0
      %v996 = vadd.f32 %v949, %v991
      %v997 = vadd.f32 %v952, %v994
      %s998 = scalar_lea.vmem %s2, 5
      %v999 = vld [vmem:[%s998] sm:$0x1]
      %v1001 = vperm.slane %v999, 0
      %v1003 = vadd.f32 %v996, %v1001
      %v1004 = vadd.f32 %v997, %v1001
      %v1005 = vadd.f32 %v1003, %v731
      %v1006 = vadd.f32 %v1004, %v732
      %1007 = vst [vmem:[#allocation2 + $0x1] sm:$0xff] %v1005
      %1008 = vst [vmem:[#allocation2 + $0x9] sm:$0xff] %v1006
      %v1009 = vld [vmem:[#allocation2 + $0x1] sm:$0xff]
      %v1010 = vld [vmem:[#allocation2 + $0x9] sm:$0xff]
      %v1011 = vld [vmem:[#allocation2] sm:$0xff]
      %v1012 = vld [vmem:[#allocation2 + $0x8] sm:$0xff]
      %s1013 = scalar_lea.vmem %s1, 2304
      %v1014 = vld [vmem:[%s1013] sm:$0xff]
      %v1015 = vld [vmem:[%s1013 + $0x8] sm:$0xff]
      %v1016 = vld [vmem:[%s1013 + $0x10] sm:$0xff]
      %v1017 = vld [vmem:[%s1013 + $0x18] sm:$0xff]
      %v1018 = vld [vmem:[%s1013 + $0x20] sm:$0xff]
      %v1019 = vld [vmem:[%s1013 + $0x28] sm:$0xff]
      %v1020 = vld [vmem:[%s1013 + $0x30] sm:$0xff]
      %v1021 = vld [vmem:[%s1013 + $0x38] sm:$0xff]
      %v1022 = vld [vmem:[%s1013 + $0x40] sm:$0xff]
      %v1023 = vld [vmem:[%s1013 + $0x48] sm:$0xff]
      %v1024 = vld [vmem:[%s1013 + $0x50] sm:$0xff]
      %v1025 = vld [vmem:[%s1013 + $0x58] sm:$0xff]
      %v1026 = vld [vmem:[%s1013 + $0x60] sm:$0xff]
      %v1027 = vld [vmem:[%s1013 + $0x68] sm:$0xff]
      %v1028 = vld [vmem:[%s1013 + $0x70] sm:$0xff]
      %v1029 = vld [vmem:[%s1013 + $0x78] sm:$0xff]
      %s1030 = scalar_lea.vmem %s1, 2432
      %v1031 = vld [vmem:[%s1030] sm:$0xff]
      %v1032 = vld [vmem:[%s1030 + $0x8] sm:$0xff]
      %v1033 = vld [vmem:[%s1030 + $0x10] sm:$0xff]
      %v1034 = vld [vmem:[%s1030 + $0x18] sm:$0xff]
      %v1035 = vld [vmem:[%s1030 + $0x20] sm:$0xff]
      %v1036 = vld [vmem:[%s1030 + $0x28] sm:$0xff]
      %v1037 = vld [vmem:[%s1030 + $0x30] sm:$0xff]
      %v1038 = vld [vmem:[%s1030 + $0x38] sm:$0xff]
      %v1039 = vld [vmem:[%s1030 + $0x40] sm:$0xff]
      %v1040 = vld [vmem:[%s1030 + $0x48] sm:$0xff]
      %v1041 = vld [vmem:[%s1030 + $0x50] sm:$0xff]
      %v1042 = vld [vmem:[%s1030 + $0x58] sm:$0xff]
      %v1043 = vld [vmem:[%s1030 + $0x60] sm:$0xff]
      %v1044 = vld [vmem:[%s1030 + $0x68] sm:$0xff]
      %v1045 = vld [vmem:[%s1030 + $0x70] sm:$0xff]
      %v1046 = vld [vmem:[%s1030 + $0x78] sm:$0xff]
      %1047 = vmatpush.msra.mxu0 %v1046
      %1048 = vmatpush.msra.mxu0 %v1045
      %1049 = vmatpush.msra.mxu0 %v1044
      %1050 = vmatpush.msra.mxu0 %v1043
      %1051 = vmatpush.msra.mxu0 %v1042
      %1052 = vmatpush.msra.mxu0 %v1041
      %1053 = vmatpush.msra.mxu0 %v1040
      %1054 = vmatpush.msra.mxu0 %v1039
      %1055 = vmatpush.msra.mxu0 %v1038
      %1056 = vmatpush.msra.mxu0 %v1037
      %1057 = vmatpush.msra.mxu0 %v1036
      %1058 = vmatpush.msra.mxu0 %v1035
      %1059 = vmatpush.msra.mxu0 %v1034
      %1060 = vmatpush.msra.mxu0 %v1033
      %1061 = vmatpush.msra.mxu0 %v1032
      %1062 = vmatpush.msra.mxu0 %v1031
      %1063 = vmatmul.f32.gmra.mxu0 %v1009
      %v1064 = vpop.f32.mrf.mxu0
      %v1065 = vadd.f32 0.0, %v1064
      %1066 = vmatmul.f32.gmra.mxu0 %v1010
      %v1067 = vpop.f32.mrf.mxu0
      %v1068 = vadd.f32 0.0, %v1067
      %1069 = vdwg.mxu0
      %1070 = vmatpush.msra.mxu0 %v1029
      %1071 = vmatpush.msra.mxu0 %v1028
      %1072 = vmatpush.msra.mxu0 %v1027
      %1073 = vmatpush.msra.mxu0 %v1026
      %1074 = vmatpush.msra.mxu0 %v1025
      %1075 = vmatpush.msra.mxu0 %v1024
      %1076 = vmatpush.msra.mxu0 %v1023
      %1077 = vmatpush.msra.mxu0 %v1022
      %1078 = vmatpush.msra.mxu0 %v1021
      %1079 = vmatpush.msra.mxu0 %v1020
      %1080 = vmatpush.msra.mxu0 %v1019
      %1081 = vmatpush.msra.mxu0 %v1018
      %1082 = vmatpush.msra.mxu0 %v1017
      %1083 = vmatpush.msra.mxu0 %v1016
      %1084 = vmatpush.msra.mxu0 %v1015
      %1085 = vmatpush.msra.mxu0 %v1014
      %1086 = vmatmul.f32.gmra.mxu0 %v1011
      %v1087 = vpop.f32.mrf.mxu0
      %v1088 = vadd.f32 %v1065, %v1087
      %1089 = vmatmul.f32.gmra.mxu0 %v1012
      %v1090 = vpop.f32.mrf.mxu0
      %v1091 = vadd.f32 %v1068, %v1090
      %1092 = vdwg.mxu0
      %v1093 = vld [vmem:[#allocation2 + $0x2] sm:$0xff]
      %v1094 = vld [vmem:[#allocation2 + $0xa] sm:$0xff]
      %s1095 = scalar_lea.vmem %s1, 2560
      %v1096 = vld [vmem:[%s1095] sm:$0xff]
      %v1097 = vld [vmem:[%s1095 + $0x8] sm:$0xff]
      %v1098 = vld [vmem:[%s1095 + $0x10] sm:$0xff]
      %v1099 = vld [vmem:[%s1095 + $0x18] sm:$0xff]
      %v1100 = vld [vmem:[%s1095 + $0x20] sm:$0xff]
      %v1101 = vld [vmem:[%s1095 + $0x28] sm:$0xff]
      %v1102 = vld [vmem:[%s1095 + $0x30] sm:$0xff]
      %v1103 = vld [vmem:[%s1095 + $0x38] sm:$0xff]
      %v1104 = vld [vmem:[%s1095 + $0x40] sm:$0xff]
      %v1105 = vld [vmem:[%s1095 + $0x48] sm:$0xff]
      %v1106 = vld [vmem:[%s1095 + $0x50] sm:$0xff]
      %v1107 = vld [vmem:[%s1095 + $0x58] sm:$0xff]
      %v1108 = vld [vmem:[%s1095 + $0x60] sm:$0xff]
      %v1109 = vld [vmem:[%s1095 + $0x68] sm:$0xff]
      %v1110 = vld [vmem:[%s1095 + $0x70] sm:$0xff]
      %v1111 = vld [vmem:[%s1095 + $0x78] sm:$0xff]
      %1112 = vmatpush.msra.mxu0 %v1111
      %1113 = vmatpush.msra.mxu0 %v1110
      %1114 = vmatpush.msra.mxu0 %v1109
      %1115 = vmatpush.msra.mxu0 %v1108
      %1116 = vmatpush.msra.mxu0 %v1107
      %1117 = vmatpush.msra.mxu0 %v1106
      %1118 = vmatpush.msra.mxu0 %v1105
      %1119 = vmatpush.msra.mxu0 %v1104
      %1120 = vmatpush.msra.mxu0 %v1103
      %1121 = vmatpush.msra.mxu0 %v1102
      %1122 = vmatpush.msra.mxu0 %v1101
      %1123 = vmatpush.msra.mxu0 %v1100
      %1124 = vmatpush.msra.mxu0 %v1099
      %1125 = vmatpush.msra.mxu0 %v1098
      %1126 = vmatpush.msra.mxu0 %v1097
      %1127 = vmatpush.msra.mxu0 %v1096
      %1128 = vmatmul.f32.gmra.mxu0 %v1093
      %v1129 = vpop.f32.mrf.mxu0
      %v1130 = vadd.f32 0.0, %v1129
      %1131 = vmatmul.f32.gmra.mxu0 %v1094
      %v1132 = vpop.f32.mrf.mxu0
      %v1133 = vadd.f32 0.0, %v1132
      %1134 = vdwg.mxu0
      %v1135 = vadd.f32 %v1088, %v1130
      %v1136 = vadd.f32 %v1091, %v1133
      %s1137 = scalar_lea.vmem %s2, 6
      %v1138 = vld [vmem:[%s1137] sm:$0x1]
      %v1140 = vperm.slane %v1138, 0
      %v1142 = vadd.f32 %v1135, %v1140
      %v1143 = vadd.f32 %v1136, %v1140
      %v1144 = vmax.f32 %v1142, 0.0
      %v1145 = vmax.f32 %v1143, 0.0
      %1146 = vst [vmem:[#allocation2 + $0x1] sm:$0xff] %v1144
      %1147 = vst [vmem:[#allocation2 + $0x9] sm:$0xff] %v1145
      %v1148 = vld [vmem:[#allocation2] sm:$0xff]
      %v1149 = vld [vmem:[#allocation2 + $0x8] sm:$0xff]
      %s1150 = scalar_lea.vmem %s1, 2688
      %v1151 = vld [vmem:[%s1150] sm:$0xff]
      %v1152 = vld [vmem:[%s1150 + $0x8] sm:$0xff]
      %v1153 = vld [vmem:[%s1150 + $0x10] sm:$0xff]
      %v1154 = vld [vmem:[%s1150 + $0x18] sm:$0xff]
      %v1155 = vld [vmem:[%s1150 + $0x20] sm:$0xff]
      %v1156 = vld [vmem:[%s1150 + $0x28] sm:$0xff]
      %v1157 = vld [vmem:[%s1150 + $0x30] sm:$0xff]
      %v1158 = vld [vmem:[%s1150 + $0x38] sm:$0xff]
      %v1159 = vld [vmem:[%s1150 + $0x40] sm:$0xff]
      %v1160 = vld [vmem:[%s1150 + $0x48] sm:$0xff]
      %v1161 = vld [vmem:[%s1150 + $0x50] sm:$0xff]
      %v1162 = vld [vmem:[%s1150 + $0x58] sm:$0xff]
      %v1163 = vld [vmem:[%s1150 + $0x60] sm:$0xff]
      %v1164 = vld [vmem:[%s1150 + $0x68] sm:$0xff]
      %v1165 = vld [vmem:[%s1150 + $0x70] sm:$0xff]
      %v1166 = vld [vmem:[%s1150 + $0x78] sm:$0xff]
      %v1167 = vld [vmem:[#allocation2 + $0x1] sm:$0xff]
      %v1168 = vld [vmem:[#allocation2 + $0x9] sm:$0xff]
      %s1169 = scalar_lea.vmem %s1, 2816
      %v1170 = vld [vmem:[%s1169] sm:$0xff]
      %v1171 = vld [vmem:[%s1169 + $0x8] sm:$0xff]
      %v1172 = vld [vmem:[%s1169 + $0x10] sm:$0xff]
      %v1173 = vld [vmem:[%s1169 + $0x18] sm:$0xff]
      %v1174 = vld [vmem:[%s1169 + $0x20] sm:$0xff]
      %v1175 = vld [vmem:[%s1169 + $0x28] sm:$0xff]
      %v1176 = vld [vmem:[%s1169 + $0x30] sm:$0xff]
      %v1177 = vld [vmem:[%s1169 + $0x38] sm:$0xff]
      %v1178 = vld [vmem:[%s1169 + $0x40] sm:$0xff]
      %v1179 = vld [vmem:[%s1169 + $0x48] sm:$0xff]
      %v1180 = vld [vmem:[%s1169 + $0x50] sm:$0xff]
      %v1181 = vld [vmem:[%s1169 + $0x58] sm:$0xff]
      %v1182 = vld [vmem:[%s1169 + $0x60] sm:$0xff]
      %v1183 = vld [vmem:[%s1169 + $0x68] sm:$0xff]
      %v1184 = vld [vmem:[%s1169 + $0x70] sm:$0xff]
      %v1185 = vld [vmem:[%s1169 + $0x78] sm:$0xff]
      %1186 = vmatpush.msra.mxu0 %v1185
      %1187 = vmatpush.msra.mxu0 %v1184
      %1188 = vmatpush.msra.mxu0 %v1183
      %1189 = vmatpush.msra.mxu0 %v1182
      %1190 = vmatpush.msra.mxu0 %v1181
      %1191 = vmatpush.msra.mxu0 %v1180
      %1192 = vmatpush.msra.mxu0 %v1179
      %1193 = vmatpush.msra.mxu0 %v1178
      %1194 = vmatpush.msra.mxu0 %v1177
      %1195 = vmatpush.msra.mxu0 %v1176
      %1196 = vmatpush.msra.mxu0 %v1175
      %1197 = vmatpush.msra.mxu0 %v1174
      %1198 = vmatpush.msra.mxu0 %v1173
      %1199 = vmatpush.msra.mxu0 %v1172
      %1200 = vmatpush.msra.mxu0 %v1171
      %1201 = vmatpush.msra.mxu0 %v1170
      %1202 = vmatmul.f32.gmra.mxu0 %v1167
      %v1203 = vpop.f32.mrf.mxu0
      %v1204 = vadd.f32 0.0, %v1203
      %1205 = vmatmul.f32.gmra.mxu0 %v1168
      %v1206 = vpop.f32.mrf.mxu0
      %v1207 = vadd.f32 0.0, %v1206
      %1208 = vdwg.mxu0
      %1209 = vmatpush.msra.mxu0 %v1166
      %1210 = vmatpush.msra.mxu0 %v1165
      %1211 = vmatpush.msra.mxu0 %v1164
      %1212 = vmatpush.msra.mxu0 %v1163
      %1213 = vmatpush.msra.mxu0 %v1162
      %1214 = vmatpush.msra.mxu0 %v1161
      %1215 = vmatpush.msra.mxu0 %v1160
      %1216 = vmatpush.msra.mxu0 %v1159
      %1217 = vmatpush.msra.mxu0 %v1158
      %1218 = vmatpush.msra.mxu0 %v1157
      %1219 = vmatpush.msra.mxu0 %v1156
      %1220 = vmatpush.msra.mxu0 %v1155
      %1221 = vmatpush.msra.mxu0 %v1154
      %1222 = vmatpush.msra.mxu0 %v1153
      %1223 = vmatpush.msra.mxu0 %v1152
      %1224 = vmatpush.msra.mxu0 %v1151
      %1225 = vmatmul.f32.gmra.mxu0 %v1148
      %v1226 = vpop.f32.mrf.mxu0
      %v1227 = vadd.f32 %v1204, %v1226
      %1228 = vmatmul.f32.gmra.mxu0 %v1149
      %v1229 = vpop.f32.mrf.mxu0
      %v1230 = vadd.f32 %v1207, %v1229
      %1231 = vdwg.mxu0
      %v1232 = vld [vmem:[#allocation2 + $0x2] sm:$0xff]
      %v1233 = vld [vmem:[#allocation2 + $0xa] sm:$0xff]
      %s1234 = scalar_lea.vmem %s1, 2944
      %v1235 = vld [vmem:[%s1234] sm:$0xff]
      %v1236 = vld [vmem:[%s1234 + $0x8] sm:$0xff]
      %v1237 = vld [vmem:[%s1234 + $0x10] sm:$0xff]
      %v1238 = vld [vmem:[%s1234 + $0x18] sm:$0xff]
      %v1239 = vld [vmem:[%s1234 + $0x20] sm:$0xff]
      %v1240 = vld [vmem:[%s1234 + $0x28] sm:$0xff]
      %v1241 = vld [vmem:[%s1234 + $0x30] sm:$0xff]
      %v1242 = vld [vmem:[%s1234 + $0x38] sm:$0xff]
      %v1243 = vld [vmem:[%s1234 + $0x40] sm:$0xff]
      %v1244 = vld [vmem:[%s1234 + $0x48] sm:$0xff]
      %v1245 = vld [vmem:[%s1234 + $0x50] sm:$0xff]
      %v1246 = vld [vmem:[%s1234 + $0x58] sm:$0xff]
      %v1247 = vld [vmem:[%s1234 + $0x60] sm:$0xff]
      %v1248 = vld [vmem:[%s1234 + $0x68] sm:$0xff]
      %v1249 = vld [vmem:[%s1234 + $0x70] sm:$0xff]
      %v1250 = vld [vmem:[%s1234 + $0x78] sm:$0xff]
      %1251 = vmatpush.msra.mxu0 %v1250
      %1252 = vmatpush.msra.mxu0 %v1249
      %1253 = vmatpush.msra.mxu0 %v1248
      %1254 = vmatpush.msra.mxu0 %v1247
      %1255 = vmatpush.msra.mxu0 %v1246
      %1256 = vmatpush.msra.mxu0 %v1245
      %1257 = vmatpush.msra.mxu0 %v1244
      %1258 = vmatpush.msra.mxu0 %v1243
      %1259 = vmatpush.msra.mxu0 %v1242
      %1260 = vmatpush.msra.mxu0 %v1241
      %1261 = vmatpush.msra.mxu0 %v1240
      %1262 = vmatpush.msra.mxu0 %v1239
      %1263 = vmatpush.msra.mxu0 %v1238
      %1264 = vmatpush.msra.mxu0 %v1237
      %1265 = vmatpush.msra.mxu0 %v1236
      %1266 = vmatpush.msra.mxu0 %v1235
      %1267 = vmatmul.f32.gmra.mxu0 %v1232
      %v1268 = vpop.f32.mrf.mxu0
      %v1269 = vadd.f32 0.0, %v1268
      %1270 = vmatmul.f32.gmra.mxu0 %v1233
      %v1271 = vpop.f32.mrf.mxu0
      %v1272 = vadd.f32 0.0, %v1271
      %1273 = vdwg.mxu0
      %v1274 = vadd.f32 %v1227, %v1269
      %v1275 = vadd.f32 %v1230, %v1272
      %s1276 = scalar_lea.vmem %s2, 7
      %v1277 = vld [vmem:[%s1276] sm:$0x1]
      %v1279 = vperm.slane %v1277, 0
      %v1281 = vadd.f32 %v1274, %v1279
      %v1282 = vadd.f32 %v1275, %v1279
      %v1283 = vadd.f32 %v1281, %v1009
      %v1284 = vadd.f32 %v1282, %v1010
      %1285 = vst [vmem:[#allocation2 + $0x1] sm:$0xff] %v1283
      %1286 = vst [vmem:[#allocation2 + $0x9] sm:$0xff] %v1284
      %v1287 = vld [vmem:[#allocation2] sm:$0xff]
      %v1288 = vld [vmem:[#allocation2 + $0x8] sm:$0xff]
      %s1289 = scalar_lea.vmem %s1, 3072
      %v1290 = vld [vmem:[%s1289] sm:$0xff]
      %v1291 = vld [vmem:[%s1289 + $0x8] sm:$0xff]
      %v1292 = vld [vmem:[%s1289 + $0x10] sm:$0xff]
      %v1293 = vld [vmem:[%s1289 + $0x18] sm:$0xff]
      %v1294 = vld [vmem:[%s1289 + $0x20] sm:$0xff]
      %v1295 = vld [vmem:[%s1289 + $0x28] sm:$0xff]
      %v1296 = vld [vmem:[%s1289 + $0x30] sm:$0xff]
      %v1297 = vld [vmem:[%s1289 + $0x38] sm:$0xff]
      %v1298 = vld [vmem:[%s1289 + $0x40] sm:$0xff]
      %v1299 = vld [vmem:[%s1289 + $0x48] sm:$0xff]
      %v1300 = vld [vmem:[%s1289 + $0x50] sm:$0xff]
      %v1301 = vld [vmem:[%s1289 + $0x58] sm:$0xff]
      %v1302 = vld [vmem:[%s1289 + $0x60] sm:$0xff]
      %v1303 = vld [vmem:[%s1289 + $0x68] sm:$0xff]
      %v1304 = vld [vmem:[%s1289 + $0x70] sm:$0xff]
      %v1305 = vld [vmem:[%s1289 + $0x78] sm:$0xff]
      %v1306 = vld [vmem:[#allocation2 + $0x1] sm:$0xff]
      %v1307 = vld [vmem:[#allocation2 + $0x9] sm:$0xff]
      %s1308 = scalar_lea.vmem %s1, 3200
      %v1309 = vld [vmem:[%s1308] sm:$0xff]
      %v1310 = vld [vmem:[%s1308 + $0x8] sm:$0xff]
      %v1311 = vld [vmem:[%s1308 + $0x10] sm:$0xff]
      %v1312 = vld [vmem:[%s1308 + $0x18] sm:$0xff]
      %v1313 = vld [vmem:[%s1308 + $0x20] sm:$0xff]
      %v1314 = vld [vmem:[%s1308 + $0x28] sm:$0xff]
      %v1315 = vld [vmem:[%s1308 + $0x30] sm:$0xff]
      %v1316 = vld [vmem:[%s1308 + $0x38] sm:$0xff]
      %v1317 = vld [vmem:[%s1308 + $0x40] sm:$0xff]
      %v1318 = vld [vmem:[%s1308 + $0x48] sm:$0xff]
      %v1319 = vld [vmem:[%s1308 + $0x50] sm:$0xff]
      %v1320 = vld [vmem:[%s1308 + $0x58] sm:$0xff]
      %v1321 = vld [vmem:[%s1308 + $0x60] sm:$0xff]
      %v1322 = vld [vmem:[%s1308 + $0x68] sm:$0xff]
      %v1323 = vld [vmem:[%s1308 + $0x70] sm:$0xff]
      %v1324 = vld [vmem:[%s1308 + $0x78] sm:$0xff]
      %1325 = vmatpush.msra.mxu0 %v1324
      %1326 = vmatpush.msra.mxu0 %v1323
      %1327 = vmatpush.msra.mxu0 %v1322
      %1328 = vmatpush.msra.mxu0 %v1321
      %1329 = vmatpush.msra.mxu0 %v1320
      %1330 = vmatpush.msra.mxu0 %v1319
      %1331 = vmatpush.msra.mxu0 %v1318
      %1332 = vmatpush.msra.mxu0 %v1317
      %1333 = vmatpush.msra.mxu0 %v1316
      %1334 = vmatpush.msra.mxu0 %v1315
      %1335 = vmatpush.msra.mxu0 %v1314
      %1336 = vmatpush.msra.mxu0 %v1313
      %1337 = vmatpush.msra.mxu0 %v1312
      %1338 = vmatpush.msra.mxu0 %v1311
      %1339 = vmatpush.msra.mxu0 %v1310
      %1340 = vmatpush.msra.mxu0 %v1309
      %1341 = vmatmul.f32.gmra.mxu0 %v1306
      %v1342 = vpop.f32.mrf.mxu0
      %v1343 = vadd.f32 0.0, %v1342
      %1344 = vmatmul.f32.gmra.mxu0 %v1307
      %v1345 = vpop.f32.mrf.mxu0
      %v1346 = vadd.f32 0.0, %v1345
      %1347 = vdwg.mxu0
      %1348 = vmatpush.msra.mxu0 %v1305
      %1349 = vmatpush.msra.mxu0 %v1304
      %1350 = vmatpush.msra.mxu0 %v1303
      %1351 = vmatpush.msra.mxu0 %v1302
      %1352 = vmatpush.msra.mxu0 %v1301
      %1353 = vmatpush.msra.mxu0 %v1300
      %1354 = vmatpush.msra.mxu0 %v1299
      %1355 = vmatpush.msra.mxu0 %v1298
      %1356 = vmatpush.msra.mxu0 %v1297
      %1357 = vmatpush.msra.mxu0 %v1296
      %1358 = vmatpush.msra.mxu0 %v1295
      %1359 = vmatpush.msra.mxu0 %v1294
      %1360 = vmatpush.msra.mxu0 %v1293
      %1361 = vmatpush.msra.mxu0 %v1292
      %1362 = vmatpush.msra.mxu0 %v1291
      %1363 = vmatpush.msra.mxu0 %v1290
      %1364 = vmatmul.f32.gmra.mxu0 %v1287
      %v1365 = vpop.f32.mrf.mxu0
      %v1366 = vadd.f32 %v1343, %v1365
      %1367 = vmatmul.f32.gmra.mxu0 %v1288
      %v1368 = vpop.f32.mrf.mxu0
      %v1369 = vadd.f32 %v1346, %v1368
      %1370 = vdwg.mxu0
      %v1371 = vld [vmem:[#allocation2 + $0x2] sm:$0xff]
      %v1372 = vld [vmem:[#allocation2 + $0xa] sm:$0xff]
      %s1373 = scalar_lea.vmem %s1, 3328
      %v1374 = vld [vmem:[%s1373] sm:$0xff]
      %v1375 = vld [vmem:[%s1373 + $0x8] sm:$0xff]
      %v1376 = vld [vmem:[%s1373 + $0x10] sm:$0xff]
      %v1377 = vld [vmem:[%s1373 + $0x18] sm:$0xff]
      %v1378 = vld [vmem:[%s1373 + $0x20] sm:$0xff]
      %v1379 = vld [vmem:[%s1373 + $0x28] sm:$0xff]
      %v1380 = vld [vmem:[%s1373 + $0x30] sm:$0xff]
      %v1381 = vld [vmem:[%s1373 + $0x38] sm:$0xff]
      %v1382 = vld [vmem:[%s1373 + $0x40] sm:$0xff]
      %v1383 = vld [vmem:[%s1373 + $0x48] sm:$0xff]
      %v1384 = vld [vmem:[%s1373 + $0x50] sm:$0xff]
      %v1385 = vld [vmem:[%s1373 + $0x58] sm:$0xff]
      %v1386 = vld [vmem:[%s1373 + $0x60] sm:$0xff]
      %v1387 = vld [vmem:[%s1373 + $0x68] sm:$0xff]
      %v1388 = vld [vmem:[%s1373 + $0x70] sm:$0xff]
      %v1389 = vld [vmem:[%s1373 + $0x78] sm:$0xff]
      %1390 = vmatpush.msra.mxu0 %v1389
      %1391 = vmatpush.msra.mxu0 %v1388
      %1392 = vmatpush.msra.mxu0 %v1387
      %1393 = vmatpush.msra.mxu0 %v1386
      %1394 = vmatpush.msra.mxu0 %v1385
      %1395 = vmatpush.msra.mxu0 %v1384
      %1396 = vmatpush.msra.mxu0 %v1383
      %1397 = vmatpush.msra.mxu0 %v1382
      %1398 = vmatpush.msra.mxu0 %v1381
      %1399 = vmatpush.msra.mxu0 %v1380
      %1400 = vmatpush.msra.mxu0 %v1379
      %1401 = vmatpush.msra.mxu0 %v1378
      %1402 = vmatpush.msra.mxu0 %v1377
      %1403 = vmatpush.msra.mxu0 %v1376
      %1404 = vmatpush.msra.mxu0 %v1375
      %1405 = vmatpush.msra.mxu0 %v1374
      %1406 = vmatmul.f32.gmra.mxu0 %v1371
      %v1407 = vpop.f32.mrf.mxu0
      %v1408 = vadd.f32 0.0, %v1407
      %1409 = vmatmul.f32.gmra.mxu0 %v1372
      %v1410 = vpop.f32.mrf.mxu0
      %v1411 = vadd.f32 0.0, %v1410
      %1412 = vdwg.mxu0
      %v1413 = vadd.f32 %v1366, %v1408
      %v1414 = vadd.f32 %v1369, %v1411
      %s1415 = scalar_lea.vmem %s2, 8
      %v1416 = vld [vmem:[%s1415] sm:$0x1]
      %v1418 = vperm.slane %v1416, 0
      %v1420 = vadd.f32 %v1413, %v1418
      %v1421 = vadd.f32 %v1414, %v1418
      %v1422 = vmul.f32 %v1420, 0.2
      %v1423 = vmul.f32 %v1421, 0.2
      %v1424 = vld [vmem:[%s165] sm:$0xff]
      %v1425 = vld [vmem:[%s165 + $0x8] sm:$0xff]
      %v1426 = vadd.f32 %v1422, %v1424
      %v1427 = vadd.f32 %v1423, %v1425
      %1428 = vst [vmem:[%s170] sm:$0xff] %v1426
      %1429 = vst [vmem:[%s170 + $0x8] sm:$0xff] %v1427
      %p1430 = scmp.lt.s32.totalorder %s14, 1
      %s1431 = scalar_select %p1430, %s14, 1
      %s1432 = smul.addr %s1431, 2
      %s1433 = smul.addr %s1432, 8
      %s1434 = scalar_lea.vmem %s3, %s1433
      // Predicated region
      $region33: #{rg_forward.1} parent=31 // pred_check
        %p1435 = pneg %p100
      $region34: #{rg_forward.1} parent=31 // pred_check_branch
        %1437 = sbr.rel (%p1435) target = $region36
      $region35: #{rg_forward.1} parent=31 // pred_region
        _
      $region36: #{rg_forward.1} parent=31 // pred_fallthru
        _
    $region32: #{rg_forward.1} parent=5 // pred_fallthru
      _
    %p1438 = scmp.le.s32.totalorder 2, %s9
    // Predicated region
    $region37: #{rg_forward.1} parent=5 // pred_check
      %p1439 = pneg %p1438
    $region38: #{rg_forward.1} parent=5 // pred_check_branch
      %1441 = sbr.rel (%p1439) target = $region40
    $region39: #{rg_forward.1} parent=5 // pred_region
      %s1442 = ssub.s32 %s9, 2
      // Predicated region
      $region41: #{rg_forward.1} parent=39 // pred_check
        %p1443 = pneg %p106
      $region42: #{rg_forward.1} parent=39 // pred_check_branch
        %1445 = sbr.rel (%p1443) target = $region44
      $region43: #{rg_forward.1} parent=39 // pred_region
        %p1446 = scmp.lt.s32.totalorder %s15, 1
        %s1447 = scalar_select %p1446, %s15, 1
        %s1448 = smul.addr %s1447, 2
        %s1449 = smul.addr %s1448, 8
        %s1450 = scalar_lea.vmem %s3, %s1449
      $region44: #{rg_forward.1} parent=39 // pred_fallthru
        _
    $region40: #{rg_forward.1} parent=5 // pred_fallthru
      _
  $region6: #{rg_forward.1} parent=0 // loop_footer
    %s13 = sadd.s32 1, %s9
  $region7: #{rg_forward.1} parent=0 // loop_footer_branch
    %8 = sbr.rel target = $region3
  $region8: #{rg_forward.1} parent=0 // loop_exit
    _

</llo_original>
